<compile_context>
chip_gen: v7x
topology: tpu7x:2x2x1
jax: 0.10.0
libtpu: 0.0.40
codegen_flags: <defaults>
</compile_context>

<pallas_src>
import functools

import jax
import jax.numpy as jnp
from jax import lax
from jax.experimental import pallas as pl
from jax.experimental.pallas import tpu as pltpu


def _round_up(v, m):
    return (v + m - 1) // m * m


def _vmem_limit_bytes():
    """Physical-VMEM-aware scoped limit (~100 MiB on v5e/v6e, ~56 MiB on v7x)."""
    try:
        phys = int(pltpu.get_tpu_info().vmem_capacity_bytes)
    except Exception:
        phys = 64 * 1024 * 1024  # conservative fallback: v7x physical VMEM
    return int(min(phys - 8 * 1024 * 1024, 100 * 1024 * 1024))


def _pick_block_channels(nc, hp, wp, budget_bytes, cap=64):
    """Largest channel batch BC dividing nc that fits the VMEM budget.

    Per channel we count: double-buffered input (2x), two double-buffered
    outputs (4x), the two box-filter scratch slabs (4x) and ~8 live
    elementwise temporaries -> 18 * hp * wp * 4 bytes.  Keeps >= 4 grid steps
    when nc allows so each of v7x's two TensorCores gets >= 2 steps.
    """
    per_chan = 18 * hp * wp * 4
    fit = max(1, budget_bytes // per_chan)
    limit = min(cap, fit)
    if nc >= 4:
        limit = min(limit, nc // 4)
    elif nc >= 2:
        limit = min(limit, nc // 2)
    limit = max(1, int(limit))
    bc = 1
    for d in range(1, limit + 1):
        if nc % d == 0:
            bc = d
    return bc


def _norm_band_matrix(dim, dim_pad, r, normalize_rows):
    """Pre-normalized banded box-mean matrix, built once in the wrapper.

    band[i,j] = 1 iff |i-j| <= r and both indices are inside the original
    (unpadded) extent; counts are the analytic per-position window sizes, so
    (An @ X @ Bn) == boxfilter(X)/N of the reference.
    """
    idx = jnp.arange(dim_pad)
    band = ((jnp.abs(idx[:, None] - idx[None, :]) <= r)
            & (idx[:, None] < dim) & (idx[None, :] < dim)).astype(jnp.float32)
    cnt = jnp.minimum(idx, r) + jnp.minimum(dim - 1 - idx, r) + 1
    cnt = jnp.maximum(cnt, 1).astype(jnp.float32)
    if normalize_rows:
        return band / cnt[:, None]
    return band / cnt[None, :]


def _make_kernel(bc, hp, wp, r, eps, rb, cb):
    f32 = jnp.float32
    n_rb = hp // rb
    n_cb = wp // cb
    r_span = (r + rb - 1) // rb   # max block-index distance hit by the band
    c_span = (r + cb - 1) // cb

    def kernel(an_ref, bn_ref, x_ref, rg_ref, rl_ref, slab_r, slab_c):
        def row_pass(img, base):
            """slab_r[base:base+hp, :] = An @ img, band-blocked over output rows."""
            for ib in range(n_rb):
                acc = None
                for kb in range(max(0, ib - r_span), min(n_rb, ib + r_span + 1)):
                    part = jnp.dot(
                        an_ref[pl.ds(ib * rb, rb), pl.ds(kb * rb, rb)],
                        img[kb * rb:(kb + 1) * rb, :],
                        preferred_element_type=f32)
                    acc = part if acc is None else acc + part
                slab_r[pl.ds(base + ib * rb, rb), :] = acc

        def col_pass():
            """slab_c = slab_r @ Bn, band-blocked over 128-wide output columns."""
            for jb in range(n_cb):
                acc = None
                for kb in range(max(0, jb - c_span), min(n_cb, jb + c_span + 1)):
                    part = jnp.dot(
                        slab_r[:, pl.ds(kb * cb, cb)],
                        bn_ref[pl.ds(kb * cb, cb), pl.ds(jb * cb, cb)],
                        preferred_element_type=f32)
                    acc = part if acc is None else acc + part
                slab_c[:, pl.ds(jb * cb, cb)] = acc

        def boxmean2(u, v):
            """Box means of two (bc, hp, wp) stacks via the fused slab passes."""
            for m in range(bc):
                row_pass(u[m], m * hp)
            for m in range(bc):
                row_pass(v[m], (bc + m) * hp)
            col_pass()
            z = slab_c[...].reshape(2 * bc, hp, wp)
            return z[:bc], z[bc:]

        I = x_ref[...]                           # (bc, hp, wp); GLGenerator uses p == I
        mean_I, mean_II = boxmean2(I, I * I)
        var_I = mean_II - mean_I * mean_I        # == cov_Ip since p == I
        a = var_I / (var_I + eps)
        b = mean_I - a * mean_I                  # mean_p == mean_I
        mean_a, mean_b = boxmean2(a, b)
        q = mean_a * I + mean_b                  # res_global
        rg_ref[...] = q
        rl_ref[...] = I - q                      # res_local = x - res_global

    return kernel


def gl_generator(x: jnp.ndarray, r: int = 21, eps: float = 0.01):
    """Pallas implementation of GLGenerator.forward.

    Args:
      x: (n, c, h, w) float32, values expected in [0, 1] (not enforced).
      r: guided-filter radius (box kernel = 2r+1).
      eps: guided-filter regularizer.

    Returns:
      (res_global, res_local), both (n, c, h, w) float32.
    """
    n, c, h, w = x.shape
    nc = n * c
    hp = _round_up(h, 8)      # sublane-aligned
    wp = _round_up(w, 128)    # lane-dense stores, fused column matmul

    vmem_limit = _vmem_limit_bytes()
    fixed = 2 * (hp * hp + wp * wp) * 4         # An/Bn (allow double-buffer)
    bc = _pick_block_channels(nc, hp, wp, max(0, vmem_limit - fixed))
    grid = (nc // bc,)

    rb = 128 if hp % 128 == 0 else hp           # row-pass band block
    cb = 128                                    # wp is always a multiple of 128

    x_flat = x.reshape(nc, h, w).astype(jnp.float32)
    if (hp, wp) != (h, w):
        x_flat = jnp.pad(x_flat, ((0, 0), (0, hp - h), (0, wp - w)))

    An = _norm_band_matrix(h, hp, r, normalize_rows=True)    # (hp, hp)
    Bn = _norm_band_matrix(w, wp, r, normalize_rows=False)   # (wp, wp)

    kernel = _make_kernel(bc, hp, wp, r, eps, rb, cb)

    out_shape = (
        jax.ShapeDtypeStruct((nc, hp, wp), jnp.float32),
        jax.ShapeDtypeStruct((nc, hp, wp), jnp.float32),
    )

    rg_flat, rl_flat = pl.pallas_call(
        kernel,
        out_shape=out_shape,
        grid=grid,
        in_specs=[
            pl.BlockSpec((hp, hp), lambda i: (0, 0)),        # An, fetched once
            pl.BlockSpec((wp, wp), lambda i: (0, 0)),        # Bn, fetched once
            pl.BlockSpec((bc, hp, wp), lambda i: (i, 0, 0)),
        ],
        out_specs=(
            pl.BlockSpec((bc, hp, wp), lambda i: (i, 0, 0)),
            pl.BlockSpec((bc, hp, wp), lambda i: (i, 0, 0)),
        ),
        scratch_shapes=[
            pltpu.VMEM((2 * bc * hp, wp), jnp.float32),      # row-pass slab
            pltpu.VMEM((2 * bc * hp, wp), jnp.float32),      # column-pass slab
        ],
        compiler_params=pltpu.CompilerParams(
            dimension_semantics=("parallel",),
            vmem_limit_bytes=int(vmem_limit)),
    )(An, Bn, x_flat)

    res_global = rg_flat[:, :h, :w].reshape(n, c, h, w)
    res_local = rl_flat[:, :h, :w].reshape(n, c, h, w)
    return res_global, res_local


def _reference(x, r, eps):
    """Pure-JAX reference mirroring the PyTorch ops (reduce_window avgpool)."""
    k = 2 * r + 1

    def boxfilter(t):
        s = lax.reduce_window(
            t, 0.0, lax.add,
            window_dimensions=(1, 1, k, k),
            window_strides=(1, 1, 1, 1),
            padding=((0, 0), (0, 0), (r, r), (r, r)))
        return s / float(k * k)

    I = x
    p = x
    N = boxfilter(jnp.ones_like(p))
    mean_I = boxfilter(I) / N
    mean_p = boxfilter(p) / N
    mean_Ip = boxfilter(I * p) / N
    cov_Ip = mean_Ip - mean_I * mean_p
    mean_II = boxfilter(I * I) / N
    var_I = mean_II - mean_I * mean_I
    a = cov_Ip / (var_I + eps)
    b = mean_p - a * mean_I
    mean_a = boxfilter(a) / N
    mean_b = boxfilter(b) / N
    rg = mean_a * I + mean_b
    return rg, x - rg


if __name__ == "__main__":
    # Small, deterministic example consistent with the module's NCHW input.
    key = jax.random.PRNGKey(0)
    n, c, h, w = 2, 4, 16, 16
    r, eps = 3, 0.01          # GLGenerator(r=3, eps=0.01); default r=21 also supported
    x = jax.random.uniform(key, (n, c, h, w), dtype=jnp.float32)

    res_global, res_local = jax.jit(
        functools.partial(gl_generator, r=r, eps=eps))(x)
    jax.block_until_ready((res_global, res_local))

    rg_ref, rl_ref = _reference(x, r, eps)
    assert res_global.shape == (n, c, h, w) and res_local.shape == (n, c, h, w)
    assert jnp.allclose(res_global, rg_ref, atol=1e-4, rtol=1e-4)
    assert jnp.allclose(res_local, rl_ref, atol=1e-4, rtol=1e-4)

    print("KERNEL_OK")
</pallas_src>

<mosaic_0001>
module attributes {stable_mosaic.version = 11 : i64} {
  func.func @kernel(%arg0: i32, %arg1: memref<16x16xf32, #tpu.memory_space<vmem>>, %arg2: memref<128x128xf32, #tpu.memory_space<vmem>>, %arg3: memref<2x16x128xf32, #tpu.memory_space<vmem>>, %arg4: memref<2x16x128xf32, #tpu.memory_space<vmem>>, %arg5: memref<2x16x128xf32, #tpu.memory_space<vmem>>, %arg6: memref<64x128xf32, #tpu.memory_space<vmem>>, %arg7: memref<64x128xf32, #tpu.memory_space<vmem>>) attributes {dimension_semantics = [#tpu.dimension_semantics<parallel>], iteration_bounds = array<i64: 4>, scalar_prefetch = 0 : i64, scratch_operands = 2 : i64, tpu.core_type = #tpu.core_type<tc>, window_params = [{pipeline_mode = #tpu.pipeline_mode<synchronous>, transform_indices = @transform_0, window_bounds = array<i64: 16, 16>}, {pipeline_mode = #tpu.pipeline_mode<synchronous>, transform_indices = @transform_1, window_bounds = array<i64: 128, 128>}, {transform_indices = @transform_2, window_bounds = array<i64: 2, 16, 128>}, {transform_indices = @transform_3, window_bounds = array<i64: 2, 16, 128>}, {transform_indices = @transform_4, window_bounds = array<i64: 2, 16, 128>}]} {
    %c0 = arith.constant 0 : index
    %c0_0 = arith.constant 0 : index
    %c0_1 = arith.constant 0 : index
    %0 = vector.load %arg3[%c0, %c0_0, %c0_1] : memref<2x16x128xf32, #tpu.memory_space<vmem>>, vector<2x16x128xf32>
    %1 = arith.mulf %0, %0 : vector<2x16x128xf32>
    %2 = vector.extract_strided_slice %0 {offsets = [0, 0, 0], sizes = [1, 16, 128], strides = [1, 1, 1]} : vector<2x16x128xf32> to vector<1x16x128xf32>
    %3 = vector.shape_cast %2 : vector<1x16x128xf32> to vector<16x128xf32>
    %c0_2 = arith.constant 0 : index
    %c0_3 = arith.constant 0 : index
    %4 = vector.load %arg1[%c0_2, %c0_3] : memref<16x16xf32, #tpu.memory_space<vmem>>, vector<16x16xf32>
    %cst = arith.constant dense<0.000000e+00> : vector<16x128xf32>
    %5 = tpu.matmul %4, %3, %cst {dimension_numbers = #tpu.dot_dimension_numbers<[1], [0], [0], [1], [0, 0, 1, 1], [], []>} : vector<16x16xf32>, vector<16x128xf32>, vector<16x128xf32> -> vector<16x128xf32>
    %c0_4 = arith.constant 0 : index
    %c0_5 = arith.constant 0 : index
    %6 = vector.load %arg6[%c0_4, %c0_5] : memref<64x128xf32, #tpu.memory_space<vmem>>, vector<16x128xf32>
    tpu.vector_store %arg6[%c0_4, %c0_5], %5 {strides = array<i32>} : memref<64x128xf32, #tpu.memory_space<vmem>>, vector<16x128xf32>,
    %7 = vector.extract_strided_slice %0 {offsets = [1, 0, 0], sizes = [1, 16, 128], strides = [1, 1, 1]} : vector<2x16x128xf32> to vector<1x16x128xf32>
    %8 = vector.shape_cast %7 : vector<1x16x128xf32> to vector<16x128xf32>
    %c0_6 = arith.constant 0 : index
    %c0_7 = arith.constant 0 : index
    %9 = vector.load %arg1[%c0_6, %c0_7] : memref<16x16xf32, #tpu.memory_space<vmem>>, vector<16x16xf32>
    %cst_8 = arith.constant dense<0.000000e+00> : vector<16x128xf32>
    %10 = tpu.matmul %9, %8, %cst_8 {dimension_numbers = #tpu.dot_dimension_numbers<[1], [0], [0], [1], [0, 0, 1, 1], [], []>} : vector<16x16xf32>, vector<16x128xf32>, vector<16x128xf32> -> vector<16x128xf32>
    %c16 = arith.constant 16 : index
    %c0_9 = arith.constant 0 : index
    %11 = vector.load %arg6[%c16, %c0_9] : memref<64x128xf32, #tpu.memory_space<vmem>>, vector<16x128xf32>
    tpu.vector_store %arg6[%c16, %c0_9], %10 {strides = array<i32>} : memref<64x128xf32, #tpu.memory_space<vmem>>, vector<16x128xf32>,
    %12 = vector.extract_strided_slice %1 {offsets = [0, 0, 0], sizes = [1, 16, 128], strides = [1, 1, 1]} : vector<2x16x128xf32> to vector<1x16x128xf32>
    %13 = vector.shape_cast %12 : vector<1x16x128xf32> to vector<16x128xf32>
    %c0_10 = arith.constant 0 : index
    %c0_11 = arith.constant 0 : index
    %14 = vector.load %arg1[%c0_10, %c0_11] : memref<16x16xf32, #tpu.memory_space<vmem>>, vector<16x16xf32>
    %cst_12 = arith.constant dense<0.000000e+00> : vector<16x128xf32>
    %15 = tpu.matmul %14, %13, %cst_12 {dimension_numbers = #tpu.dot_dimension_numbers<[1], [0], [0], [1], [0, 0, 1, 1], [], []>} : vector<16x16xf32>, vector<16x128xf32>, vector<16x128xf32> -> vector<16x128xf32>
    %c32 = arith.constant 32 : index
    %c0_13 = arith.constant 0 : index
    %16 = vector.load %arg6[%c32, %c0_13] : memref<64x128xf32, #tpu.memory_space<vmem>>, vector<16x128xf32>
    tpu.vector_store %arg6[%c32, %c0_13], %15 {strides = array<i32>} : memref<64x128xf32, #tpu.memory_space<vmem>>, vector<16x128xf32>,
    %17 = vector.extract_strided_slice %1 {offsets = [1, 0, 0], sizes = [1, 16, 128], strides = [1, 1, 1]} : vector<2x16x128xf32> to vector<1x16x128xf32>
    %18 = vector.shape_cast %17 : vector<1x16x128xf32> to vector<16x128xf32>
    %c0_14 = arith.constant 0 : index
    %c0_15 = arith.constant 0 : index
    %19 = vector.load %arg1[%c0_14, %c0_15] : memref<16x16xf32, #tpu.memory_space<vmem>>, vector<16x16xf32>
    %cst_16 = arith.constant dense<0.000000e+00> : vector<16x128xf32>
    %20 = tpu.matmul %19, %18, %cst_16 {dimension_numbers = #tpu.dot_dimension_numbers<[1], [0], [0], [1], [0, 0, 1, 1], [], []>} : vector<16x16xf32>, vector<16x128xf32>, vector<16x128xf32> -> vector<16x128xf32>
    %c48 = arith.constant 48 : index
    %c0_17 = arith.constant 0 : index
    %21 = vector.load %arg6[%c48, %c0_17] : memref<64x128xf32, #tpu.memory_space<vmem>>, vector<16x128xf32>
    tpu.vector_store %arg6[%c48, %c0_17], %20 {strides = array<i32>} : memref<64x128xf32, #tpu.memory_space<vmem>>, vector<16x128xf32>,
    %c0_18 = arith.constant 0 : index
    %c0_19 = arith.constant 0 : index
    %22 = vector.load %arg6[%c0_18, %c0_19] : memref<64x128xf32, #tpu.memory_space<vmem>>, vector<64x128xf32>
    %c0_20 = arith.constant 0 : index
    %c0_21 = arith.constant 0 : index
    %23 = vector.load %arg2[%c0_20, %c0_21] : memref<128x128xf32, #tpu.memory_space<vmem>>, vector<128x128xf32>
    %cst_22 = arith.constant dense<0.000000e+00> : vector<64x128xf32>
    %24 = tpu.matmul %22, %23, %cst_22 {dimension_numbers = #tpu.dot_dimension_numbers<[1], [0], [0], [1], [0, 0, 1, 1], [], []>} : vector<64x128xf32>, vector<128x128xf32>, vector<64x128xf32> -> vector<64x128xf32>
    %c0_23 = arith.constant 0 : index
    %c0_24 = arith.constant 0 : index
    %25 = vector.load %arg7[%c0_23, %c0_24] : memref<64x128xf32, #tpu.memory_space<vmem>>, vector<64x128xf32>
    tpu.vector_store %arg7[%c0_23, %c0_24], %24 {strides = array<i32>} : memref<64x128xf32, #tpu.memory_space<vmem>>, vector<64x128xf32>,
    %c0_25 = arith.constant 0 : index
    %c0_26 = arith.constant 0 : index
    %26 = vector.load %arg7[%c0_25, %c0_26] : memref<64x128xf32, #tpu.memory_space<vmem>>, vector<64x128xf32>
    %27 = vector.shape_cast %26 : vector<64x128xf32> to vector<4x16x128xf32>
    %28 = vector.extract_strided_slice %27 {offsets = [0, 0, 0], sizes = [2, 16, 128], strides = [1, 1, 1]} : vector<4x16x128xf32> to vector<2x16x128xf32>
    %29 = vector.extract_strided_slice %27 {offsets = [2, 0, 0], sizes = [2, 16, 128], strides = [1, 1, 1]} : vector<4x16x128xf32> to vector<2x16x128xf32>
    %30 = arith.mulf %28, %28 : vector<2x16x128xf32>
    %31 = arith.subf %29, %30 : vector<2x16x128xf32>
    %cst_27 = arith.constant 0.00999999977 : f32
    %32 = vector.broadcast %cst_27 : f32 to vector<2x16x128xf32>
    %33 = arith.addf %31, %32 : vector<2x16x128xf32>
    %34 = arith.divf %31, %33 : vector<2x16x128xf32>
    %35 = arith.mulf %34, %28 : vector<2x16x128xf32>
    %36 = arith.subf %28, %35 : vector<2x16x128xf32>
    %37 = vector.extract_strided_slice %34 {offsets = [0, 0, 0], sizes = [1, 16, 128], strides = [1, 1, 1]} : vector<2x16x128xf32> to vector<1x16x128xf32>
    %38 = vector.shape_cast %37 : vector<1x16x128xf32> to vector<16x128xf32>
    %c0_28 = arith.constant 0 : index
    %c0_29 = arith.constant 0 : index
    %39 = vector.load %arg1[%c0_28, %c0_29] : memref<16x16xf32, #tpu.memory_space<vmem>>, vector<16x16xf32>
    %cst_30 = arith.constant dense<0.000000e+00> : vector<16x128xf32>
    %40 = tpu.matmul %39, %38, %cst_30 {dimension_numbers = #tpu.dot_dimension_numbers<[1], [0], [0], [1], [0, 0, 1, 1], [], []>} : vector<16x16xf32>, vector<16x128xf32>, vector<16x128xf32> -> vector<16x128xf32>
    %c0_31 = arith.constant 0 : index
    %c0_32 = arith.constant 0 : index
    %41 = vector.load %arg6[%c0_31, %c0_32] : memref<64x128xf32, #tpu.memory_space<vmem>>, vector<16x128xf32>
    tpu.vector_store %arg6[%c0_31, %c0_32], %40 {strides = array<i32>} : memref<64x128xf32, #tpu.memory_space<vmem>>, vector<16x128xf32>,
    %42 = vector.extract_strided_slice %34 {offsets = [1, 0, 0], sizes = [1, 16, 128], strides = [1, 1, 1]} : vector<2x16x128xf32> to vector<1x16x128xf32>
    %43 = vector.shape_cast %42 : vector<1x16x128xf32> to vector<16x128xf32>
    %c0_33 = arith.constant 0 : index
    %c0_34 = arith.constant 0 : index
    %44 = vector.load %arg1[%c0_33, %c0_34] : memref<16x16xf32, #tpu.memory_space<vmem>>, vector<16x16xf32>
    %cst_35 = arith.constant dense<0.000000e+00> : vector<16x128xf32>
    %45 = tpu.matmul %44, %43, %cst_35 {dimension_numbers = #tpu.dot_dimension_numbers<[1], [0], [0], [1], [0, 0, 1, 1], [], []>} : vector<16x16xf32>, vector<16x128xf32>, vector<16x128xf32> -> vector<16x128xf32>
    %c16_36 = arith.constant 16 : index
    %c0_37 = arith.constant 0 : index
    %46 = vector.load %arg6[%c16_36, %c0_37] : memref<64x128xf32, #tpu.memory_space<vmem>>, vector<16x128xf32>
    tpu.vector_store %arg6[%c16_36, %c0_37], %45 {strides = array<i32>} : memref<64x128xf32, #tpu.memory_space<vmem>>, vector<16x128xf32>,
    %47 = vector.extract_strided_slice %36 {offsets = [0, 0, 0], sizes = [1, 16, 128], strides = [1, 1, 1]} : vector<2x16x128xf32> to vector<1x16x128xf32>
    %48 = vector.shape_cast %47 : vector<1x16x128xf32> to vector<16x128xf32>
    %c0_38 = arith.constant 0 : index
    %c0_39 = arith.constant 0 : index
    %49 = vector.load %arg1[%c0_38, %c0_39] : memref<16x16xf32, #tpu.memory_space<vmem>>, vector<16x16xf32>
    %cst_40 = arith.constant dense<0.000000e+00> : vector<16x128xf32>
    %50 = tpu.matmul %49, %48, %cst_40 {dimension_numbers = #tpu.dot_dimension_numbers<[1], [0], [0], [1], [0, 0, 1, 1], [], []>} : vector<16x16xf32>, vector<16x128xf32>, vector<16x128xf32> -> vector<16x128xf32>
    %c32_41 = arith.constant 32 : index
    %c0_42 = arith.constant 0 : index
    %51 = vector.load %arg6[%c32_41, %c0_42] : memref<64x128xf32, #tpu.memory_space<vmem>>, vector<16x128xf32>
    tpu.vector_store %arg6[%c32_41, %c0_42], %50 {strides = array<i32>} : memref<64x128xf32, #tpu.memory_space<vmem>>, vector<16x128xf32>,
    %52 = vector.extract_strided_slice %36 {offsets = [1, 0, 0], sizes = [1, 16, 128], strides = [1, 1, 1]} : vector<2x16x128xf32> to vector<1x16x128xf32>
    %53 = vector.shape_cast %52 : vector<1x16x128xf32> to vector<16x128xf32>
    %c0_43 = arith.constant 0 : index
    %c0_44 = arith.constant 0 : index
    %54 = vector.load %arg1[%c0_43, %c0_44] : memref<16x16xf32, #tpu.memory_space<vmem>>, vector<16x16xf32>
    %cst_45 = arith.constant dense<0.000000e+00> : vector<16x128xf32>
    %55 = tpu.matmul %54, %53, %cst_45 {dimension_numbers = #tpu.dot_dimension_numbers<[1], [0], [0], [1], [0, 0, 1, 1], [], []>} : vector<16x16xf32>, vector<16x128xf32>, vector<16x128xf32> -> vector<16x128xf32>
    %c48_46 = arith.constant 48 : index
    %c0_47 = arith.constant 0 : index
    %56 = vector.load %arg6[%c48_46, %c0_47] : memref<64x128xf32, #tpu.memory_space<vmem>>, vector<16x128xf32>
    tpu.vector_store %arg6[%c48_46, %c0_47], %55 {strides = array<i32>} : memref<64x128xf32, #tpu.memory_space<vmem>>, vector<16x128xf32>,
    %c0_48 = arith.constant 0 : index
    %c0_49 = arith.constant 0 : index
    %57 = vector.load %arg6[%c0_48, %c0_49] : memref<64x128xf32, #tpu.memory_space<vmem>>, vector<64x128xf32>
    %c0_50 = arith.constant 0 : index
    %c0_51 = arith.constant 0 : index
    %58 = vector.load %arg2[%c0_50, %c0_51] : memref<128x128xf32, #tpu.memory_space<vmem>>, vector<128x128xf32>
    %cst_52 = arith.constant dense<0.000000e+00> : vector<64x128xf32>
    %59 = tpu.matmul %57, %58, %cst_52 {dimension_numbers = #tpu.dot_dimension_numbers<[1], [0], [0], [1], [0, 0, 1, 1], [], []>} : vector<64x128xf32>, vector<128x128xf32>, vector<64x128xf32> -> vector<64x128xf32>
    %c0_53 = arith.constant 0 : index
    %c0_54 = arith.constant 0 : index
    %60 = vector.load %arg7[%c0_53, %c0_54] : memref<64x128xf32, #tpu.memory_space<vmem>>, vector<64x128xf32>
    tpu.vector_store %arg7[%c0_53, %c0_54], %59 {strides = array<i32>} : memref<64x128xf32, #tpu.memory_space<vmem>>, vector<64x128xf32>,
    %c0_55 = arith.constant 0 : index
    %c0_56 = arith.constant 0 : index
    %61 = vector.load %arg7[%c0_55, %c0_56] : memref<64x128xf32, #tpu.memory_space<vmem>>, vector<64x128xf32>
    %62 = vector.shape_cast %61 : vector<64x128xf32> to vector<4x16x128xf32>
    %63 = vector.extract_strided_slice %62 {offsets = [0, 0, 0], sizes = [2, 16, 128], strides = [1, 1, 1]} : vector<4x16x128xf32> to vector<2x16x128xf32>
    %64 = vector.extract_strided_slice %62 {offsets = [2, 0, 0], sizes = [2, 16, 128], strides = [1, 1, 1]} : vector<4x16x128xf32> to vector<2x16x128xf32>
    %65 = arith.mulf %63, %0 : vector<2x16x128xf32>
    %66 = arith.addf %65, %64 : vector<2x16x128xf32>
    %c0_57 = arith.constant 0 : index
    %c0_58 = arith.constant 0 : index
    %c0_59 = arith.constant 0 : index
    %67 = vector.load %arg4[%c0_57, %c0_58, %c0_59] : memref<2x16x128xf32, #tpu.memory_space<vmem>>, vector<2x16x128xf32>
    tpu.vector_store %arg4[%c0_57, %c0_58, %c0_59], %66 {strides = array<i32>} : memref<2x16x128xf32, #tpu.memory_space<vmem>>, vector<2x16x128xf32>,
    %68 = arith.subf %0, %66 : vector<2x16x128xf32>
    %c0_60 = arith.constant 0 : index
    %c0_61 = arith.constant 0 : index
    %c0_62 = arith.constant 0 : index
    %69 = vector.load %arg5[%c0_60, %c0_61, %c0_62] : memref<2x16x128xf32, #tpu.memory_space<vmem>>, vector<2x16x128xf32>
    tpu.vector_store %arg5[%c0_60, %c0_61, %c0_62], %68 {strides = array<i32>} : memref<2x16x128xf32, #tpu.memory_space<vmem>>, vector<2x16x128xf32>,
    return
  }
  func.func @transform_0(%arg0: i32) -> (i32, i32) {
    %c0_i32 = arith.constant 0 : i32
    %c0_i32_0 = arith.constant 0 : i32
    %c0_i32_1 = arith.constant 0 : i32
    return %c0_i32, %c0_i32_0 : i32, i32
  }
  func.func @transform_1(%arg0: i32) -> (i32, i32) {
    %c0_i32 = arith.constant 0 : i32
    %c0_i32_0 = arith.constant 0 : i32
    %c0_i32_1 = arith.constant 0 : i32
    return %c0_i32, %c0_i32_0 : i32, i32
  }
  func.func @transform_2(%arg0: i32) -> (i32, i32, i32) {
    %c0_i32 = arith.constant 0 : i32
    %c0_i32_0 = arith.constant 0 : i32
    %c0_i32_1 = arith.constant 0 : i32
    return %arg0, %c0_i32, %c0_i32_0 : i32, i32, i32
  }
  func.func @transform_3(%arg0: i32) -> (i32, i32, i32) {
    %c0_i32 = arith.constant 0 : i32
    %c0_i32_0 = arith.constant 0 : i32
    %c0_i32_1 = arith.constant 0 : i32
    return %arg0, %c0_i32, %c0_i32_0 : i32, i32, i32
  }
  func.func @transform_4(%arg0: i32) -> (i32, i32, i32) {
    %c0_i32 = arith.constant 0 : i32
    %c0_i32_0 = arith.constant 0 : i32
    %c0_i32_1 = arith.constant 0 : i32
    return %arg0, %c0_i32, %c0_i32_0 : i32, i32, i32
  }
}

</mosaic_0001>

<llo_original>
// kernel: gl_generator.1
$region0: #{gl_generator.1}
  #allocation0 [shape = 'u32[]', space=smem, size = 0x4, offset = 0x4, fixed_abs, tag = 'smem constant byte address 0x4 - core index']
  #allocation1 [shape = 'u32[144,128]{1,0:T(1,128)}', space=vmem, size = 0x12000, scoped, tag = 'internal scratch']
  #allocation2 [shape = 'f32[64,128]{1,0:T(8,128)}', space=vmem, size = 0x8000, scoped, tag = 'scratch operand']
  #allocation3 [shape = 'f32[64,128]{1,0:T(8,128)}', space=vmem, size = 0x8000, scoped, tag = 'scratch operand']
  %s0 = inlined_call_operand.vmem [shape: f32[16,16], index: 0, kind: input, shape index: {}]
  %s1 = inlined_call_operand.vmem [shape: f32[128,128], index: 1, kind: input, shape index: {}]
  %s2 = inlined_call_operand.vmem [shape: f32[8,16,128], index: 2, kind: input, shape index: {}]
  %s3 = inlined_call_operand.hbm [shape: f32[8,16,128], index: 3, kind: output, shape index: {0}]
  %s4 = inlined_call_operand.hbm [shape: f32[8,16,128], index: 4, kind: output, shape index: {1}]
  %5 = xla_tuple %s3, %s4
  %s6 = sld [smem:[#allocation0]]
  $region53: #{gl_generator.1} parent=0
    _
  %s8 = ssub.s32 1, %s6
  %s9 = scalar_select 0, %s8, %s6
  $region1: #{gl_generator.1} parent=0
    #allocation4 [shape = 'u8[32768]{0}', space=vmem, size = 0x8000, scoped, tag = 'output window, operand 0']
    #allocation5 [shape = 's32[2]{0}', space=sflag, size = 0x8, scoped, tag = 'scoped memory for gl_generator.1']
    #allocation6 [shape = 'u8[32768]{0}', space=vmem, size = 0x8000, scoped, tag = 'output window, operand 1']
    #allocation7 [shape = 's32[2]{0}', space=sflag, size = 0x8, scoped, tag = 'scoped memory for gl_generator.1']
    %10 = vsyncpa [#allocation5], 0
    %s11 = scalar_lea.sflag [#allocation5], 1
    %12 = vsyncpa %s11, 0
    %13 = vsyncpa [#allocation7], 0
    %s14 = scalar_lea.sflag [#allocation7], 1
    %15 = vsyncpa %s14, 0
    loop: start=0, step=1, limit=6
    $region2: #{gl_generator.1} parent=1 // loop_pre_header
      _
    $region3: #{gl_generator.1} parent=1 // loop_header
      %s17 = sphi 0, %s21
      %p18 = scmp.ge.s32.totalorder %s17, 6
      %s25 = sphi 0, %s25
      %s27 = sphi 0, %s25
      %s28 = sphi 0, %s27
      %s42 = sphi 0, %s28
      %s46 = sphi 0, %s46
      %s48 = sphi 0, %s46
      %s49 = sphi 0, %s48
      %s63 = sphi 0, %s49
      %s69 = sphi 0, %s71
      %s72 = sphi 0, %s69
      %s73 = sphi 0, %s72
      %s89 = sphi 0, %s73
      %s95 = sphi 0, %s97
      %s98 = sphi 0, %s95
      %s99 = sphi 0, %s98
      %s115 = sphi 0, %s99
      %s121 = sphi 0, %s123
      %s124 = sphi 0, %s121
      %s125 = sphi 0, %s124
      %s141 = sphi 0, %s125
    $region4: #{gl_generator.1} parent=1 // loop_header_branch
      %20 = sbr.rel (%p18) target = $region8
    $region5: #{gl_generator.1} parent=1 // loop_body
      %s22 = ssub.s32 %s17, 1
      %s23 = ssub.s32 %s17, 2
      %s24 = sadd.s32 %s17, 1
      %s26 = sadd.s32 %s25, 1
      %p29 = scmp.eq.s32.totalorder %s17, 3
      %p30 = scmp.ne.s32.totalorder %s25, %s27
      %p31 = scmp.eq.s32.totalorder %s17, 0
      %p32 = por %p30, %p31
      %p33 = scmp.ne.s32.totalorder %s25, %s27
      %p34 = scmp.eq.s32.totalorder %s22, 3
      %p35 = por %p33, %p34
      %p36 = scmp.ne.s32.totalorder %s27, %s28
      %p37 = scmp.eq.s32.totalorder %s22, 0
      %p38 = por %p36, %p37
      %p39 = scmp.ne.s32.totalorder %s27, %s28
      %p40 = scmp.eq.s32.totalorder %s23, 3
      %p41 = por %p39, %p40
      %p43 = scmp.ne.s32.totalorder %s28, %s42
      %p44 = scmp.eq.s32.totalorder %s23, 0
      %p45 = por %p43, %p44
      %s47 = sadd.s32 %s46, 1
      %p50 = scmp.eq.s32.totalorder %s17, 3
      %p51 = scmp.ne.s32.totalorder %s46, %s48
      %p52 = scmp.eq.s32.totalorder %s17, 0
      %p53 = por %p51, %p52
      %p54 = scmp.ne.s32.totalorder %s46, %s48
      %p55 = scmp.eq.s32.totalorder %s22, 3
      %p56 = por %p54, %p55
      %p57 = scmp.ne.s32.totalorder %s48, %s49
      %p58 = scmp.eq.s32.totalorder %s22, 0
      %p59 = por %p57, %p58
      %p60 = scmp.ne.s32.totalorder %s48, %s49
      %p61 = scmp.eq.s32.totalorder %s23, 3
      %p62 = por %p60, %p61
      %p64 = scmp.ne.s32.totalorder %s49, %s63
      %p65 = scmp.eq.s32.totalorder %s23, 0
      %p66 = por %p64, %p65
      %s67 = ssub.s32 %s17, %s24
      %p68 = scmp.eq.s32.totalorder %s67, 0
      %s70 = sadd.s32 %s69, 1
      %s71 = scalar_select %p68, %s69, %s70
      %p74 = pneg %p68
      %p75 = scmp.eq.s32.totalorder %s17, 3
      %p76 = por %p74, %p75
      %p77 = scmp.ne.s32.totalorder %s69, %s72
      %p78 = scmp.eq.s32.totalorder %s17, 0
      %p79 = por %p77, %p78
      %p80 = scmp.ne.s32.totalorder %s69, %s72
      %p81 = scmp.eq.s32.totalorder %s22, 3
      %p82 = por %p80, %p81
      %p83 = scmp.ne.s32.totalorder %s72, %s73
      %p84 = scmp.eq.s32.totalorder %s22, 0
      %p85 = por %p83, %p84
      %p86 = scmp.ne.s32.totalorder %s72, %s73
      %p87 = scmp.eq.s32.totalorder %s23, 3
      %p88 = por %p86, %p87
      %p90 = scmp.ne.s32.totalorder %s73, %s89
      %p91 = scmp.eq.s32.totalorder %s23, 0
      %p92 = por %p90, %p91
      %s93 = ssub.s32 %s17, %s24
      %p94 = scmp.eq.s32.totalorder %s93, 0
      %s96 = sadd.s32 %s95, 1
      %s97 = scalar_select %p94, %s95, %s96
      %p100 = pneg %p94
      %p101 = scmp.eq.s32.totalorder %s17, 3
      %p102 = por %p100, %p101
      %p103 = scmp.ne.s32.totalorder %s95, %s98
      %p104 = scmp.eq.s32.totalorder %s17, 0
      %p105 = por %p103, %p104
      %p106 = scmp.ne.s32.totalorder %s95, %s98
      %p107 = scmp.eq.s32.totalorder %s22, 3
      %p108 = por %p106, %p107
      %p109 = scmp.ne.s32.totalorder %s98, %s99
      %p110 = scmp.eq.s32.totalorder %s22, 0
      %p111 = por %p109, %p110
      %p112 = scmp.ne.s32.totalorder %s98, %s99
      %p113 = scmp.eq.s32.totalorder %s23, 3
      %p114 = por %p112, %p113
      %p116 = scmp.ne.s32.totalorder %s99, %s115
      %p117 = scmp.eq.s32.totalorder %s23, 0
      %p118 = por %p116, %p117
      %s119 = ssub.s32 %s17, %s24
      %p120 = scmp.eq.s32.totalorder %s119, 0
      %s122 = sadd.s32 %s121, 1
      %s123 = scalar_select %p120, %s121, %s122
      %p126 = pneg %p120
      %p127 = scmp.eq.s32.totalorder %s17, 3
      %p128 = por %p126, %p127
      %p129 = scmp.ne.s32.totalorder %s121, %s124
      %p130 = scmp.eq.s32.totalorder %s17, 0
      %p131 = por %p129, %p130
      %p132 = scmp.ne.s32.totalorder %s121, %s124
      %p133 = scmp.eq.s32.totalorder %s22, 3
      %p134 = por %p132, %p133
      %p135 = scmp.ne.s32.totalorder %s124, %s125
      %p136 = scmp.eq.s32.totalorder %s22, 0
      %p137 = por %p135, %p136
      %p138 = scmp.ne.s32.totalorder %s124, %s125
      %p139 = scmp.eq.s32.totalorder %s23, 3
      %p140 = por %p138, %p139
      %p142 = scmp.ne.s32.totalorder %s125, %s141
      %p143 = scmp.eq.s32.totalorder %s23, 0
      %p144 = por %p142, %p143
      %p145 = scmp.le.s32.totalorder 1, %s17
      %p146 = scmp.lt.s32.totalorder %s17, 5
      %p147 = pnand %p145, %p146
      %p148 = pneg %p147
      // Predicated region
      $region9: #{gl_generator.1} parent=5 // pred_check
        _
      $region10: #{gl_generator.1} parent=5 // pred_check_branch
        %150 = sbr.rel (%p147) target = $region12
      $region11: #{gl_generator.1} parent=5 // pred_region
        %s151 = ssub.s32 %s17, 1
        // Predicated region
        $region13: #{gl_generator.1} parent=11 // pred_check
          %p152 = pneg %p38
        $region14: #{gl_generator.1} parent=11 // pred_check_branch
          %154 = sbr.rel (%p152) target = $region16
        $region15: #{gl_generator.1} parent=11 // pred_region
          _
        $region16: #{gl_generator.1} parent=11 // pred_fallthru
          _
        // Predicated region
        $region17: #{gl_generator.1} parent=11 // pred_check
          %p155 = pneg %p59
        $region18: #{gl_generator.1} parent=11 // pred_check_branch
          %157 = sbr.rel (%p155) target = $region20
        $region19: #{gl_generator.1} parent=11 // pred_region
          _
        $region20: #{gl_generator.1} parent=11 // pred_fallthru
          _
      $region12: #{gl_generator.1} parent=5 // pred_fallthru
        _
      %p158 = scmp.lt.s32.totalorder %s17, 4
      // Predicated region
      $region21: #{gl_generator.1} parent=5 // pred_check
        %p159 = pneg %p158
      $region22: #{gl_generator.1} parent=5 // pred_check_branch
        %161 = sbr.rel (%p159) target = $region24
      $region23: #{gl_generator.1} parent=5 // pred_region
        // Predicated region
        $region25: #{gl_generator.1} parent=23 // pred_check
          %p162 = pneg %p79
        $region26: #{gl_generator.1} parent=23 // pred_check_branch
          %164 = sbr.rel (%p162) target = $region28
        $region27: #{gl_generator.1} parent=23 // pred_region
          %s165 = smul.u32 2, %s17
          %p166 = scmp.lt.s32.totalorder %s165, 7
          %s167 = scalar_select %p166, %s165, 7
          %s168 = smul.addr %s167, 2
          %s169 = smul.addr %s168, 8
          %s170 = scalar_lea.vmem %s2, %s169
          %s171 = smul.u32 2, %s17
        $region28: #{gl_generator.1} parent=23 // pred_fallthru
          _
      $region24: #{gl_generator.1} parent=5 // pred_fallthru
        _
      %p172 = scmp.le.s32.totalorder 1, %s17
      %p173 = scmp.lt.s32.totalorder %s17, 5
      %p174 = pnand %p172, %p173
      %p175 = pneg %p174
      // Predicated region
      $region29: #{gl_generator.1} parent=5 // pred_check
        _
      $region30: #{gl_generator.1} parent=5 // pred_check_branch
        %177 = sbr.rel (%p174) target = $region32
      $region31: #{gl_generator.1} parent=5 // pred_region
        %s178 = ssub.s32 %s17, 1
        %p179 = pneg %p38
        %p180 = pneg %p35
        %p181 = pneg %p59
        %p182 = pneg %p56
        %s183 = smul.u32 2, %s22
        %p184 = scmp.lt.s32.totalorder %s183, 7
        %s185 = scalar_select %p184, %s183, 7
        %s186 = smul.addr %s185, 2
        %s187 = smul.addr %s186, 8
        %s188 = scalar_lea.vmem %s2, %s187
        %p189 = pneg %p85
        %p190 = pneg %p82
        %p191 = pneg %p111
        %p192 = pneg %p108
        %s193 = sand.u32 %s98, 1
        %s194 = scalar_lea.sflag [#allocation5], %s193
        %s195 = sand.u32 %s98, 1
        %s196 = smul.addr %s195, 32
        %s197 = scalar_lea.vmem [#allocation4], %s196
        %p198 = pneg %p137
        %p199 = pneg %p134
        %s200 = sand.u32 %s124, 1
        %s201 = scalar_lea.sflag [#allocation7], %s200
        %s202 = sand.u32 %s124, 1
        %s203 = smul.addr %s202, 32
        %s204 = scalar_lea.vmem [#allocation6], %s203
        %s205 = smul.u32 2, %s22
        %p206 = scmp.lt.s32.totalorder %s205, 7
        %s207 = scalar_select %p206, %s205, 7
        %s208 = smul.addr %s207, 2
        %s209 = smul.addr %s208, 8
        %s210 = scalar_lea.vmem %s2, %s209
        %s211 = smul.u32 2, %s22
        %s212 = smul.u32 2, %s22
        %s213 = smul.u32 2, %s22
        %v214 = vld [vmem:[%s210] sm:$0xff]
        %v215 = vld [vmem:[%s210 + $0x8] sm:$0xff]
        %v216 = vld [vmem:[%s210 + $0x10] sm:$0xff]
        %v217 = vld [vmem:[%s210 + $0x18] sm:$0xff]
        %v218 = vmul.f32 %v214, %v214
        %v219 = vmul.f32 %v215, %v215
        %v220 = vmul.f32 %v216, %v216
        %v221 = vmul.f32 %v217, %v217
        %v222 = vld [vmem:[%s0] sm:$0xff]
        %v223 = vld [vmem:[%s0 + $0x8] sm:$0xff]
        %vm224 = vcmask 130048
        %v226 = vsel %vm224, %v222, 0
        %v229 = vsel %vm224, %v223, 0
        %231 = vmatprep.subr.mxu0 0.0
        %232 = vmatpush1.msra.mxu0 %v214
        %233 = vmatprep.subr.mxu0 0.0
        %234 = vmatpush1.msra.mxu0 %v215
        %235 = vmatprep.subr.mxu0 0.0
        %236 = vmatpush1.msra.mxu0 0.0
        %237 = vmatprep.subr.mxu0 0.0
        %238 = vmatpush1.msra.mxu0 0.0
        %239 = vmatprep.subr.mxu0 0.0
        %240 = vmatpush1.msra.mxu0 0.0
        %241 = vmatprep.subr.mxu0 0.0
        %242 = vmatpush1.msra.mxu0 0.0
        %243 = vmatprep.subr.mxu0 0.0
        %244 = vmatpush1.msra.mxu0 0.0
        %245 = vmatprep.subr.mxu0 0.0
        %246 = vmatpush1.msra.mxu0 0.0
        %247 = vmatprep.subr.mxu0 0.0
        %248 = vmatpush1.msra.mxu0 0.0
        %249 = vmatprep.subr.mxu0 0.0
        %250 = vmatpush1.msra.mxu0 0.0
        %251 = vmatprep.subr.mxu0 0.0
        %252 = vmatpush1.msra.mxu0 0.0
        %253 = vmatprep.subr.mxu0 0.0
        %254 = vmatpush1.msra.mxu0 0.0
        %255 = vmatprep.subr.mxu0 0.0
        %256 = vmatpush1.msra.mxu0 0.0
        %257 = vmatprep.subr.mxu0 0.0
        %258 = vmatpush1.msra.mxu0 0.0
        %259 = vmatprep.subr.mxu0 0.0
        %260 = vmatpush1.msra.mxu0 0.0
        %261 = vmatprep.subr.mxu0 0.0
        %262 = vmatpush1.msra.mxu0 0.0
        %263 = vmatprep.subr.mxu0 0.0
        %264 = vmatpush1.msra.mxu0 0.0
        %265 = vmatprep.subr.mxu0 0.0
        %266 = vmatpush1.msra.mxu0 0.0
        %267 = vmatprep.subr.mxu0 0.0
        %268 = vmatpush1.msra.mxu0 0.0
        %269 = vmatprep.subr.mxu0 0.0
        %270 = vmatpush1.msra.mxu0 0.0
        %271 = vmatprep.subr.mxu0 0.0
        %272 = vmatpush1.msra.mxu0 0.0
        %273 = vmatprep.subr.mxu0 0.0
        %274 = vmatpush1.msra.mxu0 0.0
        %275 = vmatprep.subr.mxu0 0.0
        %276 = vmatpush1.msra.mxu0 0.0
        %277 = vmatprep.subr.mxu0 0.0
        %278 = vmatpush1.msra.mxu0 0.0
        %279 = vmatprep.subr.mxu0 0.0
        %280 = vmatpush1.msra.mxu0 0.0
        %281 = vmatprep.subr.mxu0 0.0
        %282 = vmatpush1.msra.mxu0 0.0
        %283 = vmatprep.subr.mxu0 0.0
        %284 = vmatpush1.msra.mxu0 0.0
        %285 = vmatprep.subr.mxu0 0.0
        %286 = vmatpush1.msra.mxu0 0.0
        %287 = vmatprep.subr.mxu0 0.0
        %288 = vmatpush1.msra.mxu0 0.0
        %289 = vmatprep.subr.mxu0 0.0
        %290 = vmatpush1.msra.mxu0 0.0
        %291 = vmatprep.subr.mxu0 0.0
        %292 = vmatpush1.msra.mxu0 0.0
        %293 = vmatprep.subr.mxu0 0.0
        %294 = vmatpush1.msra.mxu0 0.0
        %295 = vmatprep.mubr.f32.mxu0 0.0
        %296 = vmatmul.mubr.f32.gmra.mrb[0].mxu0 %v226
        %v297 = vpop.f32.mrb[0].mxu0
        %v298 = vadd.f32 0.0, %v297
        %v299 = vpop.f32.mrb[0].mxu0
        %300 = vmatprep.mubr.f32.mxu0 0.0
        %301 = vmatmul.mubr.f32.gmra.mrb[0].mxu0 %v229
        %v302 = vpop.f32.mrb[0].mxu0
        %v303 = vadd.f32 0.0, %v302
        %v304 = vpop.f32.mrb[0].mxu0
        %305 = vdwg.mxu0
        %306 = vst [vmem:[#allocation2] sm:$0xff] %v298
        %307 = vst [vmem:[#allocation2 + $0x8] sm:$0xff] %v303
        %v308 = vld [vmem:[%s0] sm:$0xff]
        %v309 = vld [vmem:[%s0 + $0x8] sm:$0xff]
        %v311 = vsel %vm224, %v308, 0
        %v314 = vsel %vm224, %v309, 0
        %316 = vmatprep.subr.mxu0 0.0
        %317 = vmatpush1.msra.mxu0 %v216
        %318 = vmatprep.subr.mxu0 0.0
        %319 = vmatpush1.msra.mxu0 %v217
        %320 = vmatprep.subr.mxu0 0.0
        %321 = vmatpush1.msra.mxu0 0.0
        %322 = vmatprep.subr.mxu0 0.0
        %323 = vmatpush1.msra.mxu0 0.0
        %324 = vmatprep.subr.mxu0 0.0
        %325 = vmatpush1.msra.mxu0 0.0
        %326 = vmatprep.subr.mxu0 0.0
        %327 = vmatpush1.msra.mxu0 0.0
        %328 = vmatprep.subr.mxu0 0.0
        %329 = vmatpush1.msra.mxu0 0.0
        %330 = vmatprep.subr.mxu0 0.0
        %331 = vmatpush1.msra.mxu0 0.0
        %332 = vmatprep.subr.mxu0 0.0
        %333 = vmatpush1.msra.mxu0 0.0
        %334 = vmatprep.subr.mxu0 0.0
        %335 = vmatpush1.msra.mxu0 0.0
        %336 = vmatprep.subr.mxu0 0.0
        %337 = vmatpush1.msra.mxu0 0.0
        %338 = vmatprep.subr.mxu0 0.0
        %339 = vmatpush1.msra.mxu0 0.0
        %340 = vmatprep.subr.mxu0 0.0
        %341 = vmatpush1.msra.mxu0 0.0
        %342 = vmatprep.subr.mxu0 0.0
        %343 = vmatpush1.msra.mxu0 0.0
        %344 = vmatprep.subr.mxu0 0.0
        %345 = vmatpush1.msra.mxu0 0.0
        %346 = vmatprep.subr.mxu0 0.0
        %347 = vmatpush1.msra.mxu0 0.0
        %348 = vmatprep.subr.mxu0 0.0
        %349 = vmatpush1.msra.mxu0 0.0
        %350 = vmatprep.subr.mxu0 0.0
        %351 = vmatpush1.msra.mxu0 0.0
        %352 = vmatprep.subr.mxu0 0.0
        %353 = vmatpush1.msra.mxu0 0.0
        %354 = vmatprep.subr.mxu0 0.0
        %355 = vmatpush1.msra.mxu0 0.0
        %356 = vmatprep.subr.mxu0 0.0
        %357 = vmatpush1.msra.mxu0 0.0
        %358 = vmatprep.subr.mxu0 0.0
        %359 = vmatpush1.msra.mxu0 0.0
        %360 = vmatprep.subr.mxu0 0.0
        %361 = vmatpush1.msra.mxu0 0.0
        %362 = vmatprep.subr.mxu0 0.0
        %363 = vmatpush1.msra.mxu0 0.0
        %364 = vmatprep.subr.mxu0 0.0
        %365 = vmatpush1.msra.mxu0 0.0
        %366 = vmatprep.subr.mxu0 0.0
        %367 = vmatpush1.msra.mxu0 0.0
        %368 = vmatprep.subr.mxu0 0.0
        %369 = vmatpush1.msra.mxu0 0.0
        %370 = vmatprep.subr.mxu0 0.0
        %371 = vmatpush1.msra.mxu0 0.0
        %372 = vmatprep.subr.mxu0 0.0
        %373 = vmatpush1.msra.mxu0 0.0
        %374 = vmatprep.subr.mxu0 0.0
        %375 = vmatpush1.msra.mxu0 0.0
        %376 = vmatprep.subr.mxu0 0.0
        %377 = vmatpush1.msra.mxu0 0.0
        %378 = vmatprep.subr.mxu0 0.0
        %379 = vmatpush1.msra.mxu0 0.0
        %380 = vmatprep.mubr.f32.mxu0 0.0
        %381 = vmatmul.mubr.f32.gmra.mrb[0].mxu0 %v311
        %v382 = vpop.f32.mrb[0].mxu0
        %v383 = vadd.f32 0.0, %v382
        %v384 = vpop.f32.mrb[0].mxu0
        %385 = vmatprep.mubr.f32.mxu0 0.0
        %386 = vmatmul.mubr.f32.gmra.mrb[0].mxu0 %v314
        %v387 = vpop.f32.mrb[0].mxu0
        %v388 = vadd.f32 0.0, %v387
        %v389 = vpop.f32.mrb[0].mxu0
        %390 = vdwg.mxu0
        %391 = vst [vmem:[#allocation2 + $0x10] sm:$0xff] %v383
        %392 = vst [vmem:[#allocation2 + $0x18] sm:$0xff] %v388
        %v393 = vld [vmem:[%s0] sm:$0xff]
        %v394 = vld [vmem:[%s0 + $0x8] sm:$0xff]
        %v396 = vsel %vm224, %v393, 0
        %v399 = vsel %vm224, %v394, 0
        %401 = vmatprep.subr.mxu0 0.0
        %402 = vmatpush1.msra.mxu0 %v218
        %403 = vmatprep.subr.mxu0 0.0
        %404 = vmatpush1.msra.mxu0 %v219
        %405 = vmatprep.subr.mxu0 0.0
        %406 = vmatpush1.msra.mxu0 0.0
        %407 = vmatprep.subr.mxu0 0.0
        %408 = vmatpush1.msra.mxu0 0.0
        %409 = vmatprep.subr.mxu0 0.0
        %410 = vmatpush1.msra.mxu0 0.0
        %411 = vmatprep.subr.mxu0 0.0
        %412 = vmatpush1.msra.mxu0 0.0
        %413 = vmatprep.subr.mxu0 0.0
        %414 = vmatpush1.msra.mxu0 0.0
        %415 = vmatprep.subr.mxu0 0.0
        %416 = vmatpush1.msra.mxu0 0.0
        %417 = vmatprep.subr.mxu0 0.0
        %418 = vmatpush1.msra.mxu0 0.0
        %419 = vmatprep.subr.mxu0 0.0
        %420 = vmatpush1.msra.mxu0 0.0
        %421 = vmatprep.subr.mxu0 0.0
        %422 = vmatpush1.msra.mxu0 0.0
        %423 = vmatprep.subr.mxu0 0.0
        %424 = vmatpush1.msra.mxu0 0.0
        %425 = vmatprep.subr.mxu0 0.0
        %426 = vmatpush1.msra.mxu0 0.0
        %427 = vmatprep.subr.mxu0 0.0
        %428 = vmatpush1.msra.mxu0 0.0
        %429 = vmatprep.subr.mxu0 0.0
        %430 = vmatpush1.msra.mxu0 0.0
        %431 = vmatprep.subr.mxu0 0.0
        %432 = vmatpush1.msra.mxu0 0.0
        %433 = vmatprep.subr.mxu0 0.0
        %434 = vmatpush1.msra.mxu0 0.0
        %435 = vmatprep.subr.mxu0 0.0
        %436 = vmatpush1.msra.mxu0 0.0
        %437 = vmatprep.subr.mxu0 0.0
        %438 = vmatpush1.msra.mxu0 0.0
        %439 = vmatprep.subr.mxu0 0.0
        %440 = vmatpush1.msra.mxu0 0.0
        %441 = vmatprep.subr.mxu0 0.0
        %442 = vmatpush1.msra.mxu0 0.0
        %443 = vmatprep.subr.mxu0 0.0
        %444 = vmatpush1.msra.mxu0 0.0
        %445 = vmatprep.subr.mxu0 0.0
        %446 = vmatpush1.msra.mxu0 0.0
        %447 = vmatprep.subr.mxu0 0.0
        %448 = vmatpush1.msra.mxu0 0.0
        %449 = vmatprep.subr.mxu0 0.0
        %450 = vmatpush1.msra.mxu0 0.0
        %451 = vmatprep.subr.mxu0 0.0
        %452 = vmatpush1.msra.mxu0 0.0
        %453 = vmatprep.subr.mxu0 0.0
        %454 = vmatpush1.msra.mxu0 0.0
        %455 = vmatprep.subr.mxu0 0.0
        %456 = vmatpush1.msra.mxu0 0.0
        %457 = vmatprep.subr.mxu0 0.0
        %458 = vmatpush1.msra.mxu0 0.0
        %459 = vmatprep.subr.mxu0 0.0
        %460 = vmatpush1.msra.mxu0 0.0
        %461 = vmatprep.subr.mxu0 0.0
        %462 = vmatpush1.msra.mxu0 0.0
        %463 = vmatprep.subr.mxu0 0.0
        %464 = vmatpush1.msra.mxu0 0.0
        %465 = vmatprep.mubr.f32.mxu0 0.0
        %466 = vmatmul.mubr.f32.gmra.mrb[0].mxu0 %v396
        %v467 = vpop.f32.mrb[0].mxu0
        %v468 = vadd.f32 0.0, %v467
        %v469 = vpop.f32.mrb[0].mxu0
        %470 = vmatprep.mubr.f32.mxu0 0.0
        %471 = vmatmul.mubr.f32.gmra.mrb[0].mxu0 %v399
        %v472 = vpop.f32.mrb[0].mxu0
        %v473 = vadd.f32 0.0, %v472
        %v474 = vpop.f32.mrb[0].mxu0
        %475 = vdwg.mxu0
        %476 = vst [vmem:[#allocation2 + $0x20] sm:$0xff] %v468
        %477 = vst [vmem:[#allocation2 + $0x28] sm:$0xff] %v473
        %v478 = vld [vmem:[%s0] sm:$0xff]
        %v479 = vld [vmem:[%s0 + $0x8] sm:$0xff]
        %v481 = vsel %vm224, %v478, 0
        %v484 = vsel %vm224, %v479, 0
        %486 = vmatprep.subr.mxu0 0.0
        %487 = vmatpush1.msra.mxu0 %v220
        %488 = vmatprep.subr.mxu0 0.0
        %489 = vmatpush1.msra.mxu0 %v221
        %490 = vmatprep.subr.mxu0 0.0
        %491 = vmatpush1.msra.mxu0 0.0
        %492 = vmatprep.subr.mxu0 0.0
        %493 = vmatpush1.msra.mxu0 0.0
        %494 = vmatprep.subr.mxu0 0.0
        %495 = vmatpush1.msra.mxu0 0.0
        %496 = vmatprep.subr.mxu0 0.0
        %497 = vmatpush1.msra.mxu0 0.0
        %498 = vmatprep.subr.mxu0 0.0
        %499 = vmatpush1.msra.mxu0 0.0
        %500 = vmatprep.subr.mxu0 0.0
        %501 = vmatpush1.msra.mxu0 0.0
        %502 = vmatprep.subr.mxu0 0.0
        %503 = vmatpush1.msra.mxu0 0.0
        %504 = vmatprep.subr.mxu0 0.0
        %505 = vmatpush1.msra.mxu0 0.0
        %506 = vmatprep.subr.mxu0 0.0
        %507 = vmatpush1.msra.mxu0 0.0
        %508 = vmatprep.subr.mxu0 0.0
        %509 = vmatpush1.msra.mxu0 0.0
        %510 = vmatprep.subr.mxu0 0.0
        %511 = vmatpush1.msra.mxu0 0.0
        %512 = vmatprep.subr.mxu0 0.0
        %513 = vmatpush1.msra.mxu0 0.0
        %514 = vmatprep.subr.mxu0 0.0
        %515 = vmatpush1.msra.mxu0 0.0
        %516 = vmatprep.subr.mxu0 0.0
        %517 = vmatpush1.msra.mxu0 0.0
        %518 = vmatprep.subr.mxu0 0.0
        %519 = vmatpush1.msra.mxu0 0.0
        %520 = vmatprep.subr.mxu0 0.0
        %521 = vmatpush1.msra.mxu0 0.0
        %522 = vmatprep.subr.mxu0 0.0
        %523 = vmatpush1.msra.mxu0 0.0
        %524 = vmatprep.subr.mxu0 0.0
        %525 = vmatpush1.msra.mxu0 0.0
        %526 = vmatprep.subr.mxu0 0.0
        %527 = vmatpush1.msra.mxu0 0.0
        %528 = vmatprep.subr.mxu0 0.0
        %529 = vmatpush1.msra.mxu0 0.0
        %530 = vmatprep.subr.mxu0 0.0
        %531 = vmatpush1.msra.mxu0 0.0
        %532 = vmatprep.subr.mxu0 0.0
        %533 = vmatpush1.msra.mxu0 0.0
        %534 = vmatprep.subr.mxu0 0.0
        %535 = vmatpush1.msra.mxu0 0.0
        %536 = vmatprep.subr.mxu0 0.0
        %537 = vmatpush1.msra.mxu0 0.0
        %538 = vmatprep.subr.mxu0 0.0
        %539 = vmatpush1.msra.mxu0 0.0
        %540 = vmatprep.subr.mxu0 0.0
        %541 = vmatpush1.msra.mxu0 0.0
        %542 = vmatprep.subr.mxu0 0.0
        %543 = vmatpush1.msra.mxu0 0.0
        %544 = vmatprep.subr.mxu0 0.0
        %545 = vmatpush1.msra.mxu0 0.0
        %546 = vmatprep.subr.mxu0 0.0
        %547 = vmatpush1.msra.mxu0 0.0
        %548 = vmatprep.subr.mxu0 0.0
        %549 = vmatpush1.msra.mxu0 0.0
        %550 = vmatprep.mubr.f32.mxu0 0.0
        %551 = vmatmul.mubr.f32.gmra.mrb[0].mxu0 %v481
        %v552 = vpop.f32.mrb[0].mxu0
        %v553 = vadd.f32 0.0, %v552
        %v554 = vpop.f32.mrb[0].mxu0
        %555 = vmatprep.mubr.f32.mxu0 0.0
        %556 = vmatmul.mubr.f32.gmra.mrb[0].mxu0 %v484
        %v557 = vpop.f32.mrb[0].mxu0
        %v558 = vadd.f32 0.0, %v557
        %v559 = vpop.f32.mrb[0].mxu0
        %560 = vdwg.mxu0
        %561 = vst [vmem:[#allocation2 + $0x30] sm:$0xff] %v553
        %562 = vst [vmem:[#allocation2 + $0x38] sm:$0xff] %v558
        %v563 = vld [vmem:[#allocation2] sm:$0xff]
        %v564 = vld [vmem:[#allocation2 + $0x8] sm:$0xff]
        %v565 = vld [vmem:[#allocation2 + $0x10] sm:$0xff]
        %v566 = vld [vmem:[#allocation2 + $0x18] sm:$0xff]
        %v567 = vld [vmem:[#allocation2 + $0x20] sm:$0xff]
        %v568 = vld [vmem:[#allocation2 + $0x28] sm:$0xff]
        %v569 = vld [vmem:[#allocation2 + $0x30] sm:$0xff]
        %v570 = vld [vmem:[#allocation2 + $0x38] sm:$0xff]
        %v571 = vld [vmem:[%s1] sm:$0xff]
        %v572 = vld [vmem:[%s1 + $0x8] sm:$0xff]
        %v573 = vld [vmem:[%s1 + $0x10] sm:$0xff]
        %v574 = vld [vmem:[%s1 + $0x18] sm:$0xff]
        %v575 = vld [vmem:[%s1 + $0x20] sm:$0xff]
        %v576 = vld [vmem:[%s1 + $0x28] sm:$0xff]
        %v577 = vld [vmem:[%s1 + $0x30] sm:$0xff]
        %v578 = vld [vmem:[%s1 + $0x38] sm:$0xff]
        %v579 = vld [vmem:[%s1 + $0x40] sm:$0xff]
        %v580 = vld [vmem:[%s1 + $0x48] sm:$0xff]
        %v581 = vld [vmem:[%s1 + $0x50] sm:$0xff]
        %v582 = vld [vmem:[%s1 + $0x58] sm:$0xff]
        %v583 = vld [vmem:[%s1 + $0x60] sm:$0xff]
        %v584 = vld [vmem:[%s1 + $0x68] sm:$0xff]
        %v585 = vld [vmem:[%s1 + $0x70] sm:$0xff]
        %v586 = vld [vmem:[%s1 + $0x78] sm:$0xff]
        %587 = vmatprep.subr.mxu0 0.0
        %588 = vmatpush1.msra.mxu0 %v571
        %589 = vmatprep.subr.mxu0 0.0
        %590 = vmatpush1.msra.mxu0 %v572
        %591 = vmatprep.subr.mxu0 0.0
        %592 = vmatpush1.msra.mxu0 %v573
        %593 = vmatprep.subr.mxu0 0.0
        %594 = vmatpush1.msra.mxu0 %v574
        %595 = vmatprep.subr.mxu0 0.0
        %596 = vmatpush1.msra.mxu0 %v575
        %597 = vmatprep.subr.mxu0 0.0
        %598 = vmatpush1.msra.mxu0 %v576
        %599 = vmatprep.subr.mxu0 0.0
        %600 = vmatpush1.msra.mxu0 %v577
        %601 = vmatprep.subr.mxu0 0.0
        %602 = vmatpush1.msra.mxu0 %v578
        %603 = vmatprep.subr.mxu0 0.0
        %604 = vmatpush1.msra.mxu0 %v579
        %605 = vmatprep.subr.mxu0 0.0
        %606 = vmatpush1.msra.mxu0 %v580
        %607 = vmatprep.subr.mxu0 0.0
        %608 = vmatpush1.msra.mxu0 %v581
        %609 = vmatprep.subr.mxu0 0.0
        %610 = vmatpush1.msra.mxu0 %v582
        %611 = vmatprep.subr.mxu0 0.0
        %612 = vmatpush1.msra.mxu0 %v583
        %613 = vmatprep.subr.mxu0 0.0
        %614 = vmatpush1.msra.mxu0 %v584
        %615 = vmatprep.subr.mxu0 0.0
        %616 = vmatpush1.msra.mxu0 %v585
        %617 = vmatprep.subr.mxu0 0.0
        %618 = vmatpush1.msra.mxu0 %v586
        %619 = vmatprep.subr.mxu0 0.0
        %620 = vmatpush1.msra.mxu0 0.0
        %621 = vmatprep.subr.mxu0 0.0
        %622 = vmatpush1.msra.mxu0 0.0
        %623 = vmatprep.subr.mxu0 0.0
        %624 = vmatpush1.msra.mxu0 0.0
        %625 = vmatprep.subr.mxu0 0.0
        %626 = vmatpush1.msra.mxu0 0.0
        %627 = vmatprep.subr.mxu0 0.0
        %628 = vmatpush1.msra.mxu0 0.0
        %629 = vmatprep.subr.mxu0 0.0
        %630 = vmatpush1.msra.mxu0 0.0
        %631 = vmatprep.subr.mxu0 0.0
        %632 = vmatpush1.msra.mxu0 0.0
        %633 = vmatprep.subr.mxu0 0.0
        %634 = vmatpush1.msra.mxu0 0.0
        %635 = vmatprep.subr.mxu0 0.0
        %636 = vmatpush1.msra.mxu0 0.0
        %637 = vmatprep.subr.mxu0 0.0
        %638 = vmatpush1.msra.mxu0 0.0
        %639 = vmatprep.subr.mxu0 0.0
        %640 = vmatpush1.msra.mxu0 0.0
        %641 = vmatprep.subr.mxu0 0.0
        %642 = vmatpush1.msra.mxu0 0.0
        %643 = vmatprep.subr.mxu0 0.0
        %644 = vmatpush1.msra.mxu0 0.0
        %645 = vmatprep.subr.mxu0 0.0
        %646 = vmatpush1.msra.mxu0 0.0
        %647 = vmatprep.subr.mxu0 0.0
        %648 = vmatpush1.msra.mxu0 0.0
        %649 = vmatprep.subr.mxu0 0.0
        %650 = vmatpush1.msra.mxu0 0.0
        %651 = vmatprep.mubr.f32.mxu0 0.0
        %652 = vmatmul.mubr.f32.gmra.mrb[0].mxu0 %v563
        %v653 = vpop.f32.mrb[0].mxu0
        %v654 = vadd.f32 0.0, %v653
        %v655 = vpop.f32.mrb[0].mxu0
        %656 = vmatprep.mubr.f32.mxu0 0.0
        %657 = vmatmul.mubr.f32.gmra.mrb[0].mxu0 %v564
        %v658 = vpop.f32.mrb[0].mxu0
        %v659 = vadd.f32 0.0, %v658
        %v660 = vpop.f32.mrb[0].mxu0
        %661 = vmatprep.mubr.f32.mxu0 0.0
        %662 = vmatmul.mubr.f32.gmra.mrb[0].mxu0 %v565
        %v663 = vpop.f32.mrb[0].mxu0
        %v664 = vadd.f32 0.0, %v663
        %v665 = vpop.f32.mrb[0].mxu0
        %666 = vmatprep.mubr.f32.mxu0 0.0
        %667 = vmatmul.mubr.f32.gmra.mrb[0].mxu0 %v566
        %v668 = vpop.f32.mrb[0].mxu0
        %v669 = vadd.f32 0.0, %v668
        %v670 = vpop.f32.mrb[0].mxu0
        %671 = vmatprep.mubr.f32.mxu0 0.0
        %672 = vmatmul.mubr.f32.gmra.mrb[0].mxu0 %v567
        %v673 = vpop.f32.mrb[0].mxu0
        %v674 = vadd.f32 0.0, %v673
        %v675 = vpop.f32.mrb[0].mxu0
        %676 = vmatprep.mubr.f32.mxu0 0.0
        %677 = vmatmul.mubr.f32.gmra.mrb[0].mxu0 %v568
        %v678 = vpop.f32.mrb[0].mxu0
        %v679 = vadd.f32 0.0, %v678
        %v680 = vpop.f32.mrb[0].mxu0
        %681 = vmatprep.mubr.f32.mxu0 0.0
        %682 = vmatmul.mubr.f32.gmra.mrb[0].mxu0 %v569
        %v683 = vpop.f32.mrb[0].mxu0
        %v684 = vadd.f32 0.0, %v683
        %v685 = vpop.f32.mrb[0].mxu0
        %686 = vmatprep.mubr.f32.mxu0 0.0
        %687 = vmatmul.mubr.f32.gmra.mrb[0].mxu0 %v570
        %v688 = vpop.f32.mrb[0].mxu0
        %v689 = vadd.f32 0.0, %v688
        %v690 = vpop.f32.mrb[0].mxu0
        %691 = vdwg.mxu0
        %692 = vst [vmem:[#allocation3] sm:$0xff] %v654
        %693 = vst [vmem:[#allocation3 + $0x8] sm:$0xff] %v659
        %694 = vst [vmem:[#allocation3 + $0x10] sm:$0xff] %v664
        %695 = vst [vmem:[#allocation3 + $0x18] sm:$0xff] %v669
        %696 = vst [vmem:[#allocation3 + $0x20] sm:$0xff] %v674
        %697 = vst [vmem:[#allocation3 + $0x28] sm:$0xff] %v679
        %698 = vst [vmem:[#allocation3 + $0x30] sm:$0xff] %v684
        %699 = vst [vmem:[#allocation3 + $0x38] sm:$0xff] %v689
        %v700 = vld [vmem:[#allocation3] sm:$0xff]
        %v701 = vld [vmem:[#allocation3 + $0x8] sm:$0xff]
        %v702 = vld [vmem:[#allocation3 + $0x10] sm:$0xff]
        %v703 = vld [vmem:[#allocation3 + $0x18] sm:$0xff]
        %v704 = vld [vmem:[#allocation3 + $0x20] sm:$0xff]
        %v705 = vld [vmem:[#allocation3 + $0x28] sm:$0xff]
        %v706 = vld [vmem:[#allocation3 + $0x30] sm:$0xff]
        %v707 = vld [vmem:[#allocation3 + $0x38] sm:$0xff]
        %v708 = vmul.f32 %v700, %v700
        %v709 = vmul.f32 %v701, %v701
        %v710 = vmul.f32 %v702, %v702
        %v711 = vmul.f32 %v703, %v703
        %v712 = vsub.f32 %v704, %v708
        %v713 = vsub.f32 %v705, %v709
        %v714 = vsub.f32 %v706, %v710
        %v715 = vsub.f32 %v707, %v711
        %v716 = vadd.f32 %v712, 0.01
        %v717 = vadd.f32 %v713, 0.01
        %v718 = vadd.f32 %v714, 0.01
        %v719 = vadd.f32 %v715, 0.01
        %v720 = vrcp.pop %v716
        %v721 = vmul.f32 %v712, %v720
        %v722 = vrcp.pop %v717
        %v723 = vmul.f32 %v713, %v722
        %v724 = vrcp.pop %v718
        %v725 = vmul.f32 %v714, %v724
        %v726 = vrcp.pop %v719
        %v727 = vmul.f32 %v715, %v726
        %v728 = vmul.f32 %v721, %v700
        %v729 = vmul.f32 %v723, %v701
        %v730 = vmul.f32 %v725, %v702
        %v731 = vmul.f32 %v727, %v703
        %v732 = vsub.f32 %v700, %v728
        %v733 = vsub.f32 %v701, %v729
        %v734 = vsub.f32 %v702, %v730
        %v735 = vsub.f32 %v703, %v731
        %v736 = vld [vmem:[%s0] sm:$0xff]
        %v737 = vld [vmem:[%s0 + $0x8] sm:$0xff]
        %v739 = vsel %vm224, %v736, 0
        %v742 = vsel %vm224, %v737, 0
        %744 = vmatprep.subr.mxu0 0.0
        %745 = vmatpush1.msra.mxu0 %v721
        %746 = vmatprep.subr.mxu0 0.0
        %747 = vmatpush1.msra.mxu0 %v723
        %748 = vmatprep.subr.mxu0 0.0
        %749 = vmatpush1.msra.mxu0 0.0
        %750 = vmatprep.subr.mxu0 0.0
        %751 = vmatpush1.msra.mxu0 0.0
        %752 = vmatprep.subr.mxu0 0.0
        %753 = vmatpush1.msra.mxu0 0.0
        %754 = vmatprep.subr.mxu0 0.0
        %755 = vmatpush1.msra.mxu0 0.0
        %756 = vmatprep.subr.mxu0 0.0
        %757 = vmatpush1.msra.mxu0 0.0
        %758 = vmatprep.subr.mxu0 0.0
        %759 = vmatpush1.msra.mxu0 0.0
        %760 = vmatprep.subr.mxu0 0.0
        %761 = vmatpush1.msra.mxu0 0.0
        %762 = vmatprep.subr.mxu0 0.0
        %763 = vmatpush1.msra.mxu0 0.0
        %764 = vmatprep.subr.mxu0 0.0
        %765 = vmatpush1.msra.mxu0 0.0
        %766 = vmatprep.subr.mxu0 0.0
        %767 = vmatpush1.msra.mxu0 0.0
        %768 = vmatprep.subr.mxu0 0.0
        %769 = vmatpush1.msra.mxu0 0.0
        %770 = vmatprep.subr.mxu0 0.0
        %771 = vmatpush1.msra.mxu0 0.0
        %772 = vmatprep.subr.mxu0 0.0
        %773 = vmatpush1.msra.mxu0 0.0
        %774 = vmatprep.subr.mxu0 0.0
        %775 = vmatpush1.msra.mxu0 0.0
        %776 = vmatprep.subr.mxu0 0.0
        %777 = vmatpush1.msra.mxu0 0.0
        %778 = vmatprep.subr.mxu0 0.0
        %779 = vmatpush1.msra.mxu0 0.0
        %780 = vmatprep.subr.mxu0 0.0
        %781 = vmatpush1.msra.mxu0 0.0
        %782 = vmatprep.subr.mxu0 0.0
        %783 = vmatpush1.msra.mxu0 0.0
        %784 = vmatprep.subr.mxu0 0.0
        %785 = vmatpush1.msra.mxu0 0.0
        %786 = vmatprep.subr.mxu0 0.0
        %787 = vmatpush1.msra.mxu0 0.0
        %788 = vmatprep.subr.mxu0 0.0
        %789 = vmatpush1.msra.mxu0 0.0
        %790 = vmatprep.subr.mxu0 0.0
        %791 = vmatpush1.msra.mxu0 0.0
        %792 = vmatprep.subr.mxu0 0.0
        %793 = vmatpush1.msra.mxu0 0.0
        %794 = vmatprep.subr.mxu0 0.0
        %795 = vmatpush1.msra.mxu0 0.0
        %796 = vmatprep.subr.mxu0 0.0
        %797 = vmatpush1.msra.mxu0 0.0
        %798 = vmatprep.subr.mxu0 0.0
        %799 = vmatpush1.msra.mxu0 0.0
        %800 = vmatprep.subr.mxu0 0.0
        %801 = vmatpush1.msra.mxu0 0.0
        %802 = vmatprep.subr.mxu0 0.0
        %803 = vmatpush1.msra.mxu0 0.0
        %804 = vmatprep.subr.mxu0 0.0
        %805 = vmatpush1.msra.mxu0 0.0
        %806 = vmatprep.subr.mxu0 0.0
        %807 = vmatpush1.msra.mxu0 0.0
        %808 = vmatprep.mubr.f32.mxu0 0.0
        %809 = vmatmul.mubr.f32.gmra.mrb[0].mxu0 %v739
        %v810 = vpop.f32.mrb[0].mxu0
        %v811 = vadd.f32 0.0, %v810
        %v812 = vpop.f32.mrb[0].mxu0
        %813 = vmatprep.mubr.f32.mxu0 0.0
        %814 = vmatmul.mubr.f32.gmra.mrb[0].mxu0 %v742
        %v815 = vpop.f32.mrb[0].mxu0
        %v816 = vadd.f32 0.0, %v815
        %v817 = vpop.f32.mrb[0].mxu0
        %818 = vdwg.mxu0
        %819 = vst [vmem:[#allocation2] sm:$0xff] %v811
        %820 = vst [vmem:[#allocation2 + $0x8] sm:$0xff] %v816
        %v821 = vld [vmem:[%s0] sm:$0xff]
        %v822 = vld [vmem:[%s0 + $0x8] sm:$0xff]
        %v824 = vsel %vm224, %v821, 0
        %v827 = vsel %vm224, %v822, 0
        %829 = vmatprep.subr.mxu0 0.0
        %830 = vmatpush1.msra.mxu0 %v725
        %831 = vmatprep.subr.mxu0 0.0
        %832 = vmatpush1.msra.mxu0 %v727
        %833 = vmatprep.subr.mxu0 0.0
        %834 = vmatpush1.msra.mxu0 0.0
        %835 = vmatprep.subr.mxu0 0.0
        %836 = vmatpush1.msra.mxu0 0.0
        %837 = vmatprep.subr.mxu0 0.0
        %838 = vmatpush1.msra.mxu0 0.0
        %839 = vmatprep.subr.mxu0 0.0
        %840 = vmatpush1.msra.mxu0 0.0
        %841 = vmatprep.subr.mxu0 0.0
        %842 = vmatpush1.msra.mxu0 0.0
        %843 = vmatprep.subr.mxu0 0.0
        %844 = vmatpush1.msra.mxu0 0.0
        %845 = vmatprep.subr.mxu0 0.0
        %846 = vmatpush1.msra.mxu0 0.0
        %847 = vmatprep.subr.mxu0 0.0
        %848 = vmatpush1.msra.mxu0 0.0
        %849 = vmatprep.subr.mxu0 0.0
        %850 = vmatpush1.msra.mxu0 0.0
        %851 = vmatprep.subr.mxu0 0.0
        %852 = vmatpush1.msra.mxu0 0.0
        %853 = vmatprep.subr.mxu0 0.0
        %854 = vmatpush1.msra.mxu0 0.0
        %855 = vmatprep.subr.mxu0 0.0
        %856 = vmatpush1.msra.mxu0 0.0
        %857 = vmatprep.subr.mxu0 0.0
        %858 = vmatpush1.msra.mxu0 0.0
        %859 = vmatprep.subr.mxu0 0.0
        %860 = vmatpush1.msra.mxu0 0.0
        %861 = vmatprep.subr.mxu0 0.0
        %862 = vmatpush1.msra.mxu0 0.0
        %863 = vmatprep.subr.mxu0 0.0
        %864 = vmatpush1.msra.mxu0 0.0
        %865 = vmatprep.subr.mxu0 0.0
        %866 = vmatpush1.msra.mxu0 0.0
        %867 = vmatprep.subr.mxu0 0.0
        %868 = vmatpush1.msra.mxu0 0.0
        %869 = vmatprep.subr.mxu0 0.0
        %870 = vmatpush1.msra.mxu0 0.0
        %871 = vmatprep.subr.mxu0 0.0
        %872 = vmatpush1.msra.mxu0 0.0
        %873 = vmatprep.subr.mxu0 0.0
        %874 = vmatpush1.msra.mxu0 0.0
        %875 = vmatprep.subr.mxu0 0.0
        %876 = vmatpush1.msra.mxu0 0.0
        %877 = vmatprep.subr.mxu0 0.0
        %878 = vmatpush1.msra.mxu0 0.0
        %879 = vmatprep.subr.mxu0 0.0
        %880 = vmatpush1.msra.mxu0 0.0
        %881 = vmatprep.subr.mxu0 0.0
        %882 = vmatpush1.msra.mxu0 0.0
        %883 = vmatprep.subr.mxu0 0.0
        %884 = vmatpush1.msra.mxu0 0.0
        %885 = vmatprep.subr.mxu0 0.0
        %886 = vmatpush1.msra.mxu0 0.0
        %887 = vmatprep.subr.mxu0 0.0
        %888 = vmatpush1.msra.mxu0 0.0
        %889 = vmatprep.subr.mxu0 0.0
        %890 = vmatpush1.msra.mxu0 0.0
        %891 = vmatprep.subr.mxu0 0.0
        %892 = vmatpush1.msra.mxu0 0.0
        %893 = vmatprep.mubr.f32.mxu0 0.0
        %894 = vmatmul.mubr.f32.gmra.mrb[0].mxu0 %v824
        %v895 = vpop.f32.mrb[0].mxu0
        %v896 = vadd.f32 0.0, %v895
        %v897 = vpop.f32.mrb[0].mxu0
        %898 = vmatprep.mubr.f32.mxu0 0.0
        %899 = vmatmul.mubr.f32.gmra.mrb[0].mxu0 %v827
        %v900 = vpop.f32.mrb[0].mxu0
        %v901 = vadd.f32 0.0, %v900
        %v902 = vpop.f32.mrb[0].mxu0
        %903 = vdwg.mxu0
        %904 = vst [vmem:[#allocation2 + $0x10] sm:$0xff] %v896
        %905 = vst [vmem:[#allocation2 + $0x18] sm:$0xff] %v901
        %v906 = vld [vmem:[%s0] sm:$0xff]
        %v907 = vld [vmem:[%s0 + $0x8] sm:$0xff]
        %v909 = vsel %vm224, %v906, 0
        %v912 = vsel %vm224, %v907, 0
        %914 = vmatprep.subr.mxu0 0.0
        %915 = vmatpush1.msra.mxu0 %v732
        %916 = vmatprep.subr.mxu0 0.0
        %917 = vmatpush1.msra.mxu0 %v733
        %918 = vmatprep.subr.mxu0 0.0
        %919 = vmatpush1.msra.mxu0 0.0
        %920 = vmatprep.subr.mxu0 0.0
        %921 = vmatpush1.msra.mxu0 0.0
        %922 = vmatprep.subr.mxu0 0.0
        %923 = vmatpush1.msra.mxu0 0.0
        %924 = vmatprep.subr.mxu0 0.0
        %925 = vmatpush1.msra.mxu0 0.0
        %926 = vmatprep.subr.mxu0 0.0
        %927 = vmatpush1.msra.mxu0 0.0
        %928 = vmatprep.subr.mxu0 0.0
        %929 = vmatpush1.msra.mxu0 0.0
        %930 = vmatprep.subr.mxu0 0.0
        %931 = vmatpush1.msra.mxu0 0.0
        %932 = vmatprep.subr.mxu0 0.0
        %933 = vmatpush1.msra.mxu0 0.0
        %934 = vmatprep.subr.mxu0 0.0
        %935 = vmatpush1.msra.mxu0 0.0
        %936 = vmatprep.subr.mxu0 0.0
        %937 = vmatpush1.msra.mxu0 0.0
        %938 = vmatprep.subr.mxu0 0.0
        %939 = vmatpush1.msra.mxu0 0.0
        %940 = vmatprep.subr.mxu0 0.0
        %941 = vmatpush1.msra.mxu0 0.0
        %942 = vmatprep.subr.mxu0 0.0
        %943 = vmatpush1.msra.mxu0 0.0
        %944 = vmatprep.subr.mxu0 0.0
        %945 = vmatpush1.msra.mxu0 0.0
        %946 = vmatprep.subr.mxu0 0.0
        %947 = vmatpush1.msra.mxu0 0.0
        %948 = vmatprep.subr.mxu0 0.0
        %949 = vmatpush1.msra.mxu0 0.0
        %950 = vmatprep.subr.mxu0 0.0
        %951 = vmatpush1.msra.mxu0 0.0
        %952 = vmatprep.subr.mxu0 0.0
        %953 = vmatpush1.msra.mxu0 0.0
        %954 = vmatprep.subr.mxu0 0.0
        %955 = vmatpush1.msra.mxu0 0.0
        %956 = vmatprep.subr.mxu0 0.0
        %957 = vmatpush1.msra.mxu0 0.0
        %958 = vmatprep.subr.mxu0 0.0
        %959 = vmatpush1.msra.mxu0 0.0
        %960 = vmatprep.subr.mxu0 0.0
        %961 = vmatpush1.msra.mxu0 0.0
        %962 = vmatprep.subr.mxu0 0.0
        %963 = vmatpush1.msra.mxu0 0.0
        %964 = vmatprep.subr.mxu0 0.0
        %965 = vmatpush1.msra.mxu0 0.0
        %966 = vmatprep.subr.mxu0 0.0
        %967 = vmatpush1.msra.mxu0 0.0
        %968 = vmatprep.subr.mxu0 0.0
        %969 = vmatpush1.msra.mxu0 0.0
        %970 = vmatprep.subr.mxu0 0.0
        %971 = vmatpush1.msra.mxu0 0.0
        %972 = vmatprep.subr.mxu0 0.0
        %973 = vmatpush1.msra.mxu0 0.0
        %974 = vmatprep.subr.mxu0 0.0
        %975 = vmatpush1.msra.mxu0 0.0
        %976 = vmatprep.subr.mxu0 0.0
        %977 = vmatpush1.msra.mxu0 0.0
        %978 = vmatprep.mubr.f32.mxu0 0.0
        %979 = vmatmul.mubr.f32.gmra.mrb[0].mxu0 %v909
        %v980 = vpop.f32.mrb[0].mxu0
        %v981 = vadd.f32 0.0, %v980
        %v982 = vpop.f32.mrb[0].mxu0
        %983 = vmatprep.mubr.f32.mxu0 0.0
        %984 = vmatmul.mubr.f32.gmra.mrb[0].mxu0 %v912
        %v985 = vpop.f32.mrb[0].mxu0
        %v986 = vadd.f32 0.0, %v985
        %v987 = vpop.f32.mrb[0].mxu0
        %988 = vdwg.mxu0
        %989 = vst [vmem:[#allocation2 + $0x20] sm:$0xff] %v981
        %990 = vst [vmem:[#allocation2 + $0x28] sm:$0xff] %v986
        %v991 = vld [vmem:[%s0] sm:$0xff]
        %v992 = vld [vmem:[%s0 + $0x8] sm:$0xff]
        %v994 = vsel %vm224, %v991, 0
        %v997 = vsel %vm224, %v992, 0
        %999 = vmatprep.subr.mxu0 0.0
        %1000 = vmatpush1.msra.mxu0 %v734
        %1001 = vmatprep.subr.mxu0 0.0
        %1002 = vmatpush1.msra.mxu0 %v735
        %1003 = vmatprep.subr.mxu0 0.0
        %1004 = vmatpush1.msra.mxu0 0.0
        %1005 = vmatprep.subr.mxu0 0.0
        %1006 = vmatpush1.msra.mxu0 0.0
        %1007 = vmatprep.subr.mxu0 0.0
        %1008 = vmatpush1.msra.mxu0 0.0
        %1009 = vmatprep.subr.mxu0 0.0
        %1010 = vmatpush1.msra.mxu0 0.0
        %1011 = vmatprep.subr.mxu0 0.0
        %1012 = vmatpush1.msra.mxu0 0.0
        %1013 = vmatprep.subr.mxu0 0.0
        %1014 = vmatpush1.msra.mxu0 0.0
        %1015 = vmatprep.subr.mxu0 0.0
        %1016 = vmatpush1.msra.mxu0 0.0
        %1017 = vmatprep.subr.mxu0 0.0
        %1018 = vmatpush1.msra.mxu0 0.0
        %1019 = vmatprep.subr.mxu0 0.0
        %1020 = vmatpush1.msra.mxu0 0.0
        %1021 = vmatprep.subr.mxu0 0.0
        %1022 = vmatpush1.msra.mxu0 0.0
        %1023 = vmatprep.subr.mxu0 0.0
        %1024 = vmatpush1.msra.mxu0 0.0
        %1025 = vmatprep.subr.mxu0 0.0
        %1026 = vmatpush1.msra.mxu0 0.0
        %1027 = vmatprep.subr.mxu0 0.0
        %1028 = vmatpush1.msra.mxu0 0.0
        %1029 = vmatprep.subr.mxu0 0.0
        %1030 = vmatpush1.msra.mxu0 0.0
        %1031 = vmatprep.subr.mxu0 0.0
        %1032 = vmatpush1.msra.mxu0 0.0
        %1033 = vmatprep.subr.mxu0 0.0
        %1034 = vmatpush1.msra.mxu0 0.0
        %1035 = vmatprep.subr.mxu0 0.0
        %1036 = vmatpush1.msra.mxu0 0.0
        %1037 = vmatprep.subr.mxu0 0.0
        %1038 = vmatpush1.msra.mxu0 0.0
        %1039 = vmatprep.subr.mxu0 0.0
        %1040 = vmatpush1.msra.mxu0 0.0
        %1041 = vmatprep.subr.mxu0 0.0
        %1042 = vmatpush1.msra.mxu0 0.0
        %1043 = vmatprep.subr.mxu0 0.0
        %1044 = vmatpush1.msra.mxu0 0.0
        %1045 = vmatprep.subr.mxu0 0.0
        %1046 = vmatpush1.msra.mxu0 0.0
        %1047 = vmatprep.subr.mxu0 0.0
        %1048 = vmatpush1.msra.mxu0 0.0
        %1049 = vmatprep.subr.mxu0 0.0
        %1050 = vmatpush1.msra.mxu0 0.0
        %1051 = vmatprep.subr.mxu0 0.0
        %1052 = vmatpush1.msra.mxu0 0.0
        %1053 = vmatprep.subr.mxu0 0.0
        %1054 = vmatpush1.msra.mxu0 0.0
        %1055 = vmatprep.subr.mxu0 0.0
        %1056 = vmatpush1.msra.mxu0 0.0
        %1057 = vmatprep.subr.mxu0 0.0
        %1058 = vmatpush1.msra.mxu0 0.0
        %1059 = vmatprep.subr.mxu0 0.0
        %1060 = vmatpush1.msra.mxu0 0.0
        %1061 = vmatprep.subr.mxu0 0.0
        %1062 = vmatpush1.msra.mxu0 0.0
        %1063 = vmatprep.mubr.f32.mxu0 0.0
        %1064 = vmatmul.mubr.f32.gmra.mrb[0].mxu0 %v994
        %v1065 = vpop.f32.mrb[0].mxu0
        %v1066 = vadd.f32 0.0, %v1065
        %v1067 = vpop.f32.mrb[0].mxu0
        %1068 = vmatprep.mubr.f32.mxu0 0.0
        %1069 = vmatmul.mubr.f32.gmra.mrb[0].mxu0 %v997
        %v1070 = vpop.f32.mrb[0].mxu0
        %v1071 = vadd.f32 0.0, %v1070
        %v1072 = vpop.f32.mrb[0].mxu0
        %1073 = vdwg.mxu0
        %1074 = vst [vmem:[#allocation2 + $0x30] sm:$0xff] %v1066
        %1075 = vst [vmem:[#allocation2 + $0x38] sm:$0xff] %v1071
        %v1076 = vld [vmem:[#allocation2] sm:$0xff]
        %v1077 = vld [vmem:[#allocation2 + $0x8] sm:$0xff]
        %v1078 = vld [vmem:[#allocation2 + $0x10] sm:$0xff]
        %v1079 = vld [vmem:[#allocation2 + $0x18] sm:$0xff]
        %v1080 = vld [vmem:[#allocation2 + $0x20] sm:$0xff]
        %v1081 = vld [vmem:[#allocation2 + $0x28] sm:$0xff]
        %v1082 = vld [vmem:[#allocation2 + $0x30] sm:$0xff]
        %v1083 = vld [vmem:[#allocation2 + $0x38] sm:$0xff]
        %v1084 = vld [vmem:[%s1] sm:$0xff]
        %v1085 = vld [vmem:[%s1 + $0x8] sm:$0xff]
        %v1086 = vld [vmem:[%s1 + $0x10] sm:$0xff]
        %v1087 = vld [vmem:[%s1 + $0x18] sm:$0xff]
        %v1088 = vld [vmem:[%s1 + $0x20] sm:$0xff]
        %v1089 = vld [vmem:[%s1 + $0x28] sm:$0xff]
        %v1090 = vld [vmem:[%s1 + $0x30] sm:$0xff]
        %v1091 = vld [vmem:[%s1 + $0x38] sm:$0xff]
        %v1092 = vld [vmem:[%s1 + $0x40] sm:$0xff]
        %v1093 = vld [vmem:[%s1 + $0x48] sm:$0xff]
        %v1094 = vld [vmem:[%s1 + $0x50] sm:$0xff]
        %v1095 = vld [vmem:[%s1 + $0x58] sm:$0xff]
        %v1096 = vld [vmem:[%s1 + $0x60] sm:$0xff]
        %v1097 = vld [vmem:[%s1 + $0x68] sm:$0xff]
        %v1098 = vld [vmem:[%s1 + $0x70] sm:$0xff]
        %v1099 = vld [vmem:[%s1 + $0x78] sm:$0xff]
        %1100 = vmatprep.subr.mxu0 0.0
        %1101 = vmatpush1.msra.mxu0 %v1084
        %1102 = vmatprep.subr.mxu0 0.0
        %1103 = vmatpush1.msra.mxu0 %v1085
        %1104 = vmatprep.subr.mxu0 0.0
        %1105 = vmatpush1.msra.mxu0 %v1086
        %1106 = vmatprep.subr.mxu0 0.0
        %1107 = vmatpush1.msra.mxu0 %v1087
        %1108 = vmatprep.subr.mxu0 0.0
        %1109 = vmatpush1.msra.mxu0 %v1088
        %1110 = vmatprep.subr.mxu0 0.0
        %1111 = vmatpush1.msra.mxu0 %v1089
        %1112 = vmatprep.subr.mxu0 0.0
        %1113 = vmatpush1.msra.mxu0 %v1090
        %1114 = vmatprep.subr.mxu0 0.0
        %1115 = vmatpush1.msra.mxu0 %v1091
        %1116 = vmatprep.subr.mxu0 0.0
        %1117 = vmatpush1.msra.mxu0 %v1092
        %1118 = vmatprep.subr.mxu0 0.0
        %1119 = vmatpush1.msra.mxu0 %v1093
        %1120 = vmatprep.subr.mxu0 0.0
        %1121 = vmatpush1.msra.mxu0 %v1094
        %1122 = vmatprep.subr.mxu0 0.0
        %1123 = vmatpush1.msra.mxu0 %v1095
        %1124 = vmatprep.subr.mxu0 0.0
        %1125 = vmatpush1.msra.mxu0 %v1096
        %1126 = vmatprep.subr.mxu0 0.0
        %1127 = vmatpush1.msra.mxu0 %v1097
        %1128 = vmatprep.subr.mxu0 0.0
        %1129 = vmatpush1.msra.mxu0 %v1098
        %1130 = vmatprep.subr.mxu0 0.0
        %1131 = vmatpush1.msra.mxu0 %v1099
        %1132 = vmatprep.subr.mxu0 0.0
        %1133 = vmatpush1.msra.mxu0 0.0
        %1134 = vmatprep.subr.mxu0 0.0
        %1135 = vmatpush1.msra.mxu0 0.0
        %1136 = vmatprep.subr.mxu0 0.0
        %1137 = vmatpush1.msra.mxu0 0.0
        %1138 = vmatprep.subr.mxu0 0.0
        %1139 = vmatpush1.msra.mxu0 0.0
        %1140 = vmatprep.subr.mxu0 0.0
        %1141 = vmatpush1.msra.mxu0 0.0
        %1142 = vmatprep.subr.mxu0 0.0
        %1143 = vmatpush1.msra.mxu0 0.0
        %1144 = vmatprep.subr.mxu0 0.0
        %1145 = vmatpush1.msra.mxu0 0.0
        %1146 = vmatprep.subr.mxu0 0.0
        %1147 = vmatpush1.msra.mxu0 0.0
        %1148 = vmatprep.subr.mxu0 0.0
        %1149 = vmatpush1.msra.mxu0 0.0
        %1150 = vmatprep.subr.mxu0 0.0
        %1151 = vmatpush1.msra.mxu0 0.0
        %1152 = vmatprep.subr.mxu0 0.0
        %1153 = vmatpush1.msra.mxu0 0.0
        %1154 = vmatprep.subr.mxu0 0.0
        %1155 = vmatpush1.msra.mxu0 0.0
        %1156 = vmatprep.subr.mxu0 0.0
        %1157 = vmatpush1.msra.mxu0 0.0
        %1158 = vmatprep.subr.mxu0 0.0
        %1159 = vmatpush1.msra.mxu0 0.0
        %1160 = vmatprep.subr.mxu0 0.0
        %1161 = vmatpush1.msra.mxu0 0.0
        %1162 = vmatprep.subr.mxu0 0.0
        %1163 = vmatpush1.msra.mxu0 0.0
        %1164 = vmatprep.mubr.f32.mxu0 0.0
        %1165 = vmatmul.mubr.f32.gmra.mrb[0].mxu0 %v1076
        %v1166 = vpop.f32.mrb[0].mxu0
        %v1167 = vadd.f32 0.0, %v1166
        %v1168 = vpop.f32.mrb[0].mxu0
        %1169 = vmatprep.mubr.f32.mxu0 0.0
        %1170 = vmatmul.mubr.f32.gmra.mrb[0].mxu0 %v1077
        %v1171 = vpop.f32.mrb[0].mxu0
        %v1172 = vadd.f32 0.0, %v1171
        %v1173 = vpop.f32.mrb[0].mxu0
        %1174 = vmatprep.mubr.f32.mxu0 0.0
        %1175 = vmatmul.mubr.f32.gmra.mrb[0].mxu0 %v1078
        %v1176 = vpop.f32.mrb[0].mxu0
        %v1177 = vadd.f32 0.0, %v1176
        %v1178 = vpop.f32.mrb[0].mxu0
        %1179 = vmatprep.mubr.f32.mxu0 0.0
        %1180 = vmatmul.mubr.f32.gmra.mrb[0].mxu0 %v1079
        %v1181 = vpop.f32.mrb[0].mxu0
        %v1182 = vadd.f32 0.0, %v1181
        %v1183 = vpop.f32.mrb[0].mxu0
        %1184 = vmatprep.mubr.f32.mxu0 0.0
        %1185 = vmatmul.mubr.f32.gmra.mrb[0].mxu0 %v1080
        %v1186 = vpop.f32.mrb[0].mxu0
        %v1187 = vadd.f32 0.0, %v1186
        %v1188 = vpop.f32.mrb[0].mxu0
        %1189 = vmatprep.mubr.f32.mxu0 0.0
        %1190 = vmatmul.mubr.f32.gmra.mrb[0].mxu0 %v1081
        %v1191 = vpop.f32.mrb[0].mxu0
        %v1192 = vadd.f32 0.0, %v1191
        %v1193 = vpop.f32.mrb[0].mxu0
        %1194 = vmatprep.mubr.f32.mxu0 0.0
        %1195 = vmatmul.mubr.f32.gmra.mrb[0].mxu0 %v1082
        %v1196 = vpop.f32.mrb[0].mxu0
        %v1197 = vadd.f32 0.0, %v1196
        %v1198 = vpop.f32.mrb[0].mxu0
        %1199 = vmatprep.mubr.f32.mxu0 0.0
        %1200 = vmatmul.mubr.f32.gmra.mrb[0].mxu0 %v1083
        %v1201 = vpop.f32.mrb[0].mxu0
        %v1202 = vadd.f32 0.0, %v1201
        %v1203 = vpop.f32.mrb[0].mxu0
        %1204 = vdwg.mxu0
        %1205 = vst [vmem:[#allocation3] sm:$0xff] %v1167
        %1206 = vst [vmem:[#allocation3 + $0x8] sm:$0xff] %v1172
        %1207 = vst [vmem:[#allocation3 + $0x10] sm:$0xff] %v1177
        %1208 = vst [vmem:[#allocation3 + $0x18] sm:$0xff] %v1182
        %1209 = vst [vmem:[#allocation3 + $0x20] sm:$0xff] %v1187
        %1210 = vst [vmem:[#allocation3 + $0x28] sm:$0xff] %v1192
        %1211 = vst [vmem:[#allocation3 + $0x30] sm:$0xff] %v1197
        %1212 = vst [vmem:[#allocation3 + $0x38] sm:$0xff] %v1202
        %v1213 = vld [vmem:[#allocation3] sm:$0xff]
        %v1214 = vld [vmem:[#allocation3 + $0x8] sm:$0xff]
        %v1215 = vld [vmem:[#allocation3 + $0x10] sm:$0xff]
        %v1216 = vld [vmem:[#allocation3 + $0x18] sm:$0xff]
        %v1217 = vld [vmem:[#allocation3 + $0x20] sm:$0xff]
        %v1218 = vld [vmem:[#allocation3 + $0x28] sm:$0xff]
        %v1219 = vld [vmem:[#allocation3 + $0x30] sm:$0xff]
        %v1220 = vld [vmem:[#allocation3 + $0x38] sm:$0xff]
        %v1221 = vmul.f32 %v1213, %v214
        %v1222 = vmul.f32 %v1214, %v215
        %v1223 = vmul.f32 %v1215, %v216
        %v1224 = vmul.f32 %v1216, %v217
        %v1225 = vadd.f32 %v1221, %v1217
        %v1226 = vadd.f32 %v1222, %v1218
        %v1227 = vadd.f32 %v1223, %v1219
        %v1228 = vadd.f32 %v1224, %v1220
        %1229 = vst [vmem:[%s197] sm:$0xff] %v1225
        %1230 = vst [vmem:[%s197 + $0x8] sm:$0xff] %v1226
        %1231 = vst [vmem:[%s197 + $0x10] sm:$0xff] %v1227
        %1232 = vst [vmem:[%s197 + $0x18] sm:$0xff] %v1228
        %v1233 = vsub.f32 %v214, %v1225
        %v1234 = vsub.f32 %v215, %v1226
        %v1235 = vsub.f32 %v216, %v1227
        %v1236 = vsub.f32 %v217, %v1228
        %1237 = vst [vmem:[%s204] sm:$0xff] %v1233
        %1238 = vst [vmem:[%s204 + $0x8] sm:$0xff] %v1234
        %1239 = vst [vmem:[%s204 + $0x10] sm:$0xff] %v1235
        %1240 = vst [vmem:[%s204 + $0x18] sm:$0xff] %v1236
        %s1241 = sand.u32 %s98, 1
        %s1242 = scalar_lea.sflag [#allocation5], %s1241
        %s1243 = sand.u32 %s98, 1
        %s1244 = smul.addr %s1243, 32
        %s1245 = scalar_lea.vmem [#allocation4], %s1244
        %s1246 = sand.u32 %s124, 1
        %s1247 = scalar_lea.sflag [#allocation7], %s1246
        %s1248 = sand.u32 %s124, 1
        %s1249 = smul.addr %s1248, 32
        %s1250 = scalar_lea.vmem [#allocation6], %s1249
        // Predicated region
        $region33: #{gl_generator.1} parent=31 // pred_check
          %p1251 = pneg %p108
        $region34: #{gl_generator.1} parent=31 // pred_check_branch
          %1253 = sbr.rel (%p1251) target = $region36
        $region35: #{gl_generator.1} parent=31 // pred_region
          %s1254 = smul.u32 2, %s22
          %s1256 = ssub.s32 512, 512
          %1257 = vsyncadd %s1242, %s1256
          %s1258 = smul.addr %s1254, 2
          %s1259 = smul.addr %s1258, 128
          %s1260 = scalar_lea.hbm %s3, %s1259
          %s1261 = sshll.u32 %s1245, 4
          %s1262 = int_to_ptr.vmem [resolvable:$true] %s1261
          %1267 = dma.vmem_to_hbm [thread:$0]  %s1262, 512, %s1260, %s1242, 128, 128, 8
        $region36: #{gl_generator.1} parent=31 // pred_fallthru
          _
        // Predicated region
        $region37: #{gl_generator.1} parent=31 // pred_check
          %p1268 = pneg %p134
        $region38: #{gl_generator.1} parent=31 // pred_check_branch
          %1270 = sbr.rel (%p1268) target = $region40
        $region39: #{gl_generator.1} parent=31 // pred_region
          %s1271 = smul.u32 2, %s22
          %s1273 = ssub.s32 512, 512
          %1274 = vsyncadd %s1247, %s1273
          %s1275 = smul.addr %s1271, 2
          %s1276 = smul.addr %s1275, 128
          %s1277 = scalar_lea.hbm %s4, %s1276
          %s1278 = sshll.u32 %s1250, 4
          %s1279 = int_to_ptr.vmem [resolvable:$true] %s1278
          %1284 = dma.vmem_to_hbm [thread:$0]  %s1279, 512, %s1277, %s1247, 128, 128, 8
        $region40: #{gl_generator.1} parent=31 // pred_fallthru
          _
      $region32: #{gl_generator.1} parent=5 // pred_fallthru
        _
      %p1285 = scmp.le.s32.totalorder 2, %s17
      // Predicated region
      $region41: #{gl_generator.1} parent=5 // pred_check
        %p1286 = pneg %p1285
      $region42: #{gl_generator.1} parent=5 // pred_check_branch
        %1288 = sbr.rel (%p1286) target = $region44
      $region43: #{gl_generator.1} parent=5 // pred_region
        %s1289 = ssub.s32 %s17, 2
        // Predicated region
        $region45: #{gl_generator.1} parent=43 // pred_check
          %p1290 = pneg %p114
        $region46: #{gl_generator.1} parent=43 // pred_check_branch
          %1292 = sbr.rel (%p1290) target = $region48
        $region47: #{gl_generator.1} parent=43 // pred_region
          %s1293 = sand.u32 %s99, 1
          %s1294 = scalar_lea.sflag [#allocation5], %s1293
          %s1295 = sand.u32 %s99, 1
          %s1296 = smul.addr %s1295, 32
          %s1297 = scalar_lea.vmem [#allocation4], %s1296
          %1298 = dma.done %s1294, 512
        $region48: #{gl_generator.1} parent=43 // pred_fallthru
          _
        // Predicated region
        $region49: #{gl_generator.1} parent=43 // pred_check
          %p1299 = pneg %p140
        $region50: #{gl_generator.1} parent=43 // pred_check_branch
          %1301 = sbr.rel (%p1299) target = $region52
        $region51: #{gl_generator.1} parent=43 // pred_region
          %s1302 = sand.u32 %s125, 1
          %s1303 = scalar_lea.sflag [#allocation7], %s1302
          %s1304 = sand.u32 %s125, 1
          %s1305 = smul.addr %s1304, 32
          %s1306 = scalar_lea.vmem [#allocation6], %s1305
          %1307 = dma.done %s1303, 512
        $region52: #{gl_generator.1} parent=43 // pred_fallthru
          _
      $region44: #{gl_generator.1} parent=5 // pred_fallthru
        _
    $region6: #{gl_generator.1} parent=1 // loop_footer
      %s21 = sadd.s32 1, %s17
    $region7: #{gl_generator.1} parent=1 // loop_footer_branch
      %16 = sbr.rel target = $region3
    $region8: #{gl_generator.1} parent=1 // loop_exit
      _
    %1308 = vsyncpa [#allocation5], 1
    %s1309 = scalar_lea.sflag [#allocation5], 1
    %1310 = vsyncpa %s1309, 1
    %1311 = vsyncpa [#allocation7], 1
    %s1312 = scalar_lea.sflag [#allocation7], 1
    %1313 = vsyncpa %s1312, 1

</llo_original>
